<compile_context>
chip_gen: v7x
topology: tpu7x:2x2x1
jax: 0.10.0
libtpu: 0.0.40
codegen_flags: <defaults>
</compile_context>

<pallas_src>
import jax
import jax.numpy as jnp
from jax.experimental import pallas as pl
from jax.experimental.pallas import tpu as pltpu

N_FEATURES = 2
HIDDEN = 100
CLASSES = 2


def _net_kernel(x_ref, w1_ref, b1_ref, wd_ref, bd_ref, out_ref):
    """Fused MLP forward for one batch tile.

    x_ref : (TB, 2)    input rows
    w1_ref: (2, 100)   fc1 weight (in, out) layout
    b1_ref: (1, 100)   fc1 bias
    wd_ref: (100, 1)   w2[:,1] - w2[:,0]  (2-class softmax collapse)
    bd_ref: (1, 1)     b2[1]  - b2[0]
    out_ref:(TB, 2)    softmax probabilities
    """
    x = x_ref[...]                                   # (TB, 2) f32

    # fc1 + ReLU on the VPU: K=2 is far too small to be worth the MXU.
    h = (x[:, 0:1] * w1_ref[0:1, :]
         + x[:, 1:2] * w1_ref[1:2, :]
         + b1_ref[...])                              # (TB, HIDDEN)
    h = jnp.maximum(h, 0.0)

    # fc3 + softmax collapsed: d = logit1 - logit0, p1 = sigmoid(d), p0 = 1 - p1.
    d = jnp.dot(h, wd_ref[...], preferred_element_type=jnp.float32) + bd_ref[...]  # (TB, 1)

    # Numerically stable sigmoid.
    z = jnp.exp(-jnp.abs(d))
    inv = 1.0 / (1.0 + z)
    p1 = jnp.where(d >= 0.0, inv, z * inv)

    out_ref[:, 0:1] = 1.0 - p1
    out_ref[:, 1:2] = p1


def net_forward(x, w1, b1, w2, b2, *, tb=512):
    """x: (B, N_FEATURES) float32 -> (B, CLASSES) float32 softmax probabilities."""
    B = x.shape[0]
    TB = min(tb, B)                     # batch tile (rows are independent)

    # Wrapper-side precompute: bias as a (1, H) row, and the 2-class softmax
    # collapse terms wd = w2[:,1]-w2[:,0], bd = b2[1]-b2[0].
    b1_2d = b1.reshape(1, HIDDEN)
    wd = (w2[:, 1:2] - w2[:, 0:1]).astype(jnp.float32)      # (HIDDEN, 1)
    bd = (b2[1] - b2[0]).reshape(1, 1).astype(jnp.float32)  # (1, 1)

    grid = (pl.cdiv(B, TB),)

    return pl.pallas_call(
        _net_kernel,
        out_shape=jax.ShapeDtypeStruct((B, CLASSES), jnp.float32),
        grid_spec=pl.GridSpec(
            grid=grid,
            in_specs=[
                pl.BlockSpec((TB, N_FEATURES), lambda i: (i, 0)),     # x: tiled over batch
                pl.BlockSpec((N_FEATURES, HIDDEN), lambda i: (0, 0)),  # w1: resident
                pl.BlockSpec((1, HIDDEN), lambda i: (0, 0)),           # b1: resident
                pl.BlockSpec((HIDDEN, 1), lambda i: (0, 0)),           # wd: resident
                pl.BlockSpec((1, 1), lambda i: (0, 0)),                # bd: resident
            ],
            out_specs=pl.BlockSpec((TB, CLASSES), lambda i: (i, 0)),
        ),
        compiler_params=pltpu.CompilerParams(
            # Batch tiles are fully independent -> lets v7x shard across both TCs.
            dimension_semantics=("parallel",),
        ),
    )(x, w1, b1_2d, wd, bd)


def init_params(key):
    """Deterministic init mimicking nn.Linear default: U(-1/sqrt(fan_in), 1/sqrt(fan_in)).

    Weights are stored as (in_features, out_features) — transposed vs. PyTorch.
    """
    k1, k2, k3, k4 = jax.random.split(key, 4)
    bound1 = 1.0 / jnp.sqrt(N_FEATURES)
    bound2 = 1.0 / jnp.sqrt(HIDDEN)
    w1 = jax.random.uniform(k1, (N_FEATURES, HIDDEN), jnp.float32, -bound1, bound1)
    b1 = jax.random.uniform(k2, (HIDDEN,), jnp.float32, -bound1, bound1)
    w2 = jax.random.uniform(k3, (HIDDEN, CLASSES), jnp.float32, -bound2, bound2)
    b2 = jax.random.uniform(k4, (CLASSES,), jnp.float32, -bound2, bound2)
    return w1, b1, w2, b2


def reference_forward(x, w1, b1, w2, b2):
    """Pure-JAX reference matching the PyTorch semantics."""
    h = jnp.maximum(x @ w1 + b1, 0.0)
    logits = h @ w2 + b2
    return jax.nn.softmax(logits, axis=1)


if __name__ == "__main__":
    key = jax.random.PRNGKey(0)
    kx, kp = jax.random.split(key)

    # Batch large enough to exercise the batch-tiled grid (4 steps at TB=512),
    # still tiny in absolute terms (2048 x 2 f32).
    batch = 2048
    x = jax.random.normal(kx, (batch, N_FEATURES), jnp.float32)
    w1, b1, w2, b2 = init_params(kp)

    out = jax.block_until_ready(net_forward(x, w1, b1, w2, b2))
    ref = reference_forward(x, w1, b1, w2, b2)

    assert out.shape == (batch, CLASSES)
    # Tolerance relaxed slightly vs. the exp-softmax form: the sigmoid collapse
    # computes the same function with a different rounding path.
    assert jnp.allclose(out, ref, atol=1e-4, rtol=1e-4), "mismatch vs reference"
    # Softmax rows sum to 1.
    assert jnp.allclose(jnp.sum(out, axis=1), 1.0, atol=1e-5)

    print("KERNEL_OK")
</pallas_src>

<mosaic_0001>
module attributes {stable_mosaic.version = 11 : i64} {
  func.func @_net_kernel(%arg0: i32, %arg1: memref<512x2xf32, #tpu.memory_space<vmem>>, %arg2: memref<2x100xf32, #tpu.memory_space<vmem>>, %arg3: memref<1x100xf32, #tpu.memory_space<vmem>>, %arg4: memref<100x1xf32, #tpu.memory_space<vmem>>, %arg5: memref<1x1xf32, #tpu.memory_space<vmem>>, %arg6: memref<512x2xf32, #tpu.memory_space<vmem>>) attributes {dimension_semantics = [#tpu.dimension_semantics<parallel>], iteration_bounds = array<i64: 4>, scalar_prefetch = 0 : i64, scratch_operands = 0 : i64, tpu.core_type = #tpu.core_type<tc>, window_params = [{transform_indices = @transform_0, window_bounds = array<i64: 512, 2>}, {pipeline_mode = #tpu.pipeline_mode<synchronous>, transform_indices = @transform_1, window_bounds = array<i64: 2, 100>}, {pipeline_mode = #tpu.pipeline_mode<synchronous>, transform_indices = @transform_2, window_bounds = array<i64: 1, 100>}, {pipeline_mode = #tpu.pipeline_mode<synchronous>, transform_indices = @transform_3, window_bounds = array<i64: 100, 1>}, {pipeline_mode = #tpu.pipeline_mode<synchronous>, transform_indices = @transform_4, window_bounds = array<i64: 1, 1>}, {transform_indices = @transform_5, window_bounds = array<i64: 512, 2>}]} {
    %c0 = arith.constant 0 : index
    %c0_0 = arith.constant 0 : index
    %0 = vector.load %arg1[%c0, %c0_0] : memref<512x2xf32, #tpu.memory_space<vmem>>, vector<512x2xf32>
    %1 = vector.extract_strided_slice %0 {offsets = [0, 0], sizes = [512, 1], strides = [1, 1]} : vector<512x2xf32> to vector<512x1xf32>
    %c0_1 = arith.constant 0 : index
    %c0_2 = arith.constant 0 : index
    %2 = vector.load %arg2[%c0_1, %c0_2] : memref<2x100xf32, #tpu.memory_space<vmem>>, vector<1x100xf32>
    %3 = vector.broadcast %1 : vector<512x1xf32> to vector<512x100xf32>
    %4 = vector.broadcast %2 : vector<1x100xf32> to vector<512x100xf32>
    %5 = arith.mulf %3, %4 : vector<512x100xf32>
    %6 = vector.extract_strided_slice %0 {offsets = [0, 1], sizes = [512, 1], strides = [1, 1]} : vector<512x2xf32> to vector<512x1xf32>
    %c1 = arith.constant 1 : index
    %c0_3 = arith.constant 0 : index
    %7 = vector.load %arg2[%c1, %c0_3] : memref<2x100xf32, #tpu.memory_space<vmem>>, vector<1x100xf32>
    %8 = vector.broadcast %6 : vector<512x1xf32> to vector<512x100xf32>
    %9 = vector.broadcast %7 : vector<1x100xf32> to vector<512x100xf32>
    %10 = arith.mulf %8, %9 : vector<512x100xf32>
    %11 = arith.addf %5, %10 : vector<512x100xf32>
    %c0_4 = arith.constant 0 : index
    %c0_5 = arith.constant 0 : index
    %12 = vector.load %arg3[%c0_4, %c0_5] : memref<1x100xf32, #tpu.memory_space<vmem>>, vector<1x100xf32>
    %13 = vector.broadcast %12 : vector<1x100xf32> to vector<512x100xf32>
    %14 = arith.addf %11, %13 : vector<512x100xf32>
    %cst = arith.constant 0.000000e+00 : f32
    %15 = vector.broadcast %cst : f32 to vector<512x100xf32>
    %16 = arith.maximumf %14, %15 : vector<512x100xf32>
    %c0_6 = arith.constant 0 : index
    %c0_7 = arith.constant 0 : index
    %17 = vector.load %arg4[%c0_6, %c0_7] : memref<100x1xf32, #tpu.memory_space<vmem>>, vector<100x1xf32>
    %cst_8 = arith.constant dense<0.000000e+00> : vector<512x1xf32>
    %18 = tpu.matmul %16, %17, %cst_8 {dimension_numbers = #tpu.dot_dimension_numbers<[1], [0], [0], [1], [0, 0, 1, 1], [], []>} : vector<512x100xf32>, vector<100x1xf32>, vector<512x1xf32> -> vector<512x1xf32>
    %c0_9 = arith.constant 0 : index
    %c0_10 = arith.constant 0 : index
    %19 = vector.load %arg5[%c0_9, %c0_10] : memref<1x1xf32, #tpu.memory_space<vmem>>, vector<1x1xf32>
    %20 = vector.broadcast %19 : vector<1x1xf32> to vector<512x1xf32>
    %21 = arith.addf %18, %20 : vector<512x1xf32>
    %22 = math.absf %21 : vector<512x1xf32>
    %cst_11 = arith.constant 0.000000e+00 : f32
    %23 = vector.broadcast %cst_11 : f32 to vector<512x1xf32>
    %24 = arith.subf %23, %22 : vector<512x1xf32>
    %25 = math.exp %24 : vector<512x1xf32>
    %cst_12 = arith.constant 1.000000e+00 : f32
    %26 = vector.broadcast %cst_12 : f32 to vector<512x1xf32>
    %27 = arith.addf %26, %25 : vector<512x1xf32>
    %cst_13 = arith.constant 1.000000e+00 : f32
    %28 = vector.broadcast %cst_13 : f32 to vector<512x1xf32>
    %29 = arith.divf %28, %27 : vector<512x1xf32>
    %cst_14 = arith.constant 0.000000e+00 : f32
    %30 = vector.broadcast %cst_14 : f32 to vector<512x1xf32>
    %31 = arith.cmpf oge, %21, %30 : vector<512x1xf32>
    %32 = arith.mulf %25, %29 : vector<512x1xf32>
    %33 = arith.select %31, %29, %32 : vector<512x1xi1>, vector<512x1xf32>
    %cst_15 = arith.constant 1.000000e+00 : f32
    %34 = vector.broadcast %cst_15 : f32 to vector<512x1xf32>
    %35 = arith.subf %34, %33 : vector<512x1xf32>
    %c0_16 = arith.constant 0 : index
    %c0_17 = arith.constant 0 : index
    %36 = vector.load %arg6[%c0_16, %c0_17] : memref<512x2xf32, #tpu.memory_space<vmem>>, vector<512x1xf32>
    tpu.vector_store %arg6[%c0_16, %c0_17], %35 {strides = array<i32>} : memref<512x2xf32, #tpu.memory_space<vmem>>, vector<512x1xf32>,
    %c0_18 = arith.constant 0 : index
    %c1_19 = arith.constant 1 : index
    %37 = vector.load %arg6[%c0_18, %c1_19] : memref<512x2xf32, #tpu.memory_space<vmem>>, vector<512x1xf32>
    tpu.vector_store %arg6[%c0_18, %c1_19], %33 {strides = array<i32>} : memref<512x2xf32, #tpu.memory_space<vmem>>, vector<512x1xf32>,
    return
  }
  func.func @transform_0(%arg0: i32) -> (i32, i32) {
    %c0_i32 = arith.constant 0 : i32
    %c0_i32_0 = arith.constant 0 : i32
    return %arg0, %c0_i32 : i32, i32
  }
  func.func @transform_1(%arg0: i32) -> (i32, i32) {
    %c0_i32 = arith.constant 0 : i32
    %c0_i32_0 = arith.constant 0 : i32
    %c0_i32_1 = arith.constant 0 : i32
    return %c0_i32, %c0_i32_0 : i32, i32
  }
  func.func @transform_2(%arg0: i32) -> (i32, i32) {
    %c0_i32 = arith.constant 0 : i32
    %c0_i32_0 = arith.constant 0 : i32
    %c0_i32_1 = arith.constant 0 : i32
    return %c0_i32, %c0_i32_0 : i32, i32
  }
  func.func @transform_3(%arg0: i32) -> (i32, i32) {
    %c0_i32 = arith.constant 0 : i32
    %c0_i32_0 = arith.constant 0 : i32
    %c0_i32_1 = arith.constant 0 : i32
    return %c0_i32, %c0_i32_0 : i32, i32
  }
  func.func @transform_4(%arg0: i32) -> (i32, i32) {
    %c0_i32 = arith.constant 0 : i32
    %c0_i32_0 = arith.constant 0 : i32
    %c0_i32_1 = arith.constant 0 : i32
    return %c0_i32, %c0_i32_0 : i32, i32
  }
  func.func @transform_5(%arg0: i32) -> (i32, i32) {
    %c0_i32 = arith.constant 0 : i32
    %c0_i32_0 = arith.constant 0 : i32
    return %arg0, %c0_i32 : i32, i32
  }
}

</mosaic_0001>

<llo_original>
// kernel: tpu_custom_call.1
$region0: #{tpu_custom_call.1}
  #allocation0 [shape = 'u32[]', space=smem, size = 0x4, offset = 0x4, fixed_abs, tag = 'smem constant byte address 0x4 - core index']
  #allocation1 [shape = 'u32[144,128]{1,0:T(1,128)}', space=vmem, size = 0x12000, scoped, tag = 'internal scratch']
  #allocation2 [shape = 'f32[1,1]{1,0:T(1,128)S(1)}', space=vmem, size = 0x200, scoped, tag = 'scoped memory for tpu_custom_call.1']
  %s0 = inlined_call_operand.vmem [shape: f32[2048,2], index: 0, kind: input, shape index: {}]
  %s1 = inlined_call_operand.vmem [shape: f32[2,100], index: 1, kind: input, shape index: {}]
  %s2 = inlined_call_operand.vmem [shape: f32[1,100], index: 2, kind: input, shape index: {}]
  %s3 = inlined_call_operand.vmem [shape: f32[100,1], index: 3, kind: input, shape index: {}]
  %s4 = inlined_call_operand.<no memory space> [shape: f32[1,1], index: 4, kind: input, shape index: {}]
  %s5 = inlined_call_operand.vmem [shape: f32[2048,2], index: 5, kind: output, shape index: {}]
  %s6 = sld [smem:[#allocation0]]
  $region53: #{tpu_custom_call.1} parent=0
    _
  %s8 = ssub.s32 1, %s6
  %s9 = scalar_select 0, %s8, %s6
  %v10 = vstv %s4
  %11 = vst [vmem:[#allocation2] sm:$0x1] %v10
  loop: start=0, step=1, limit=6
  $region2: #{tpu_custom_call.1} parent=0 // loop_pre_header
    _
  $region3: #{tpu_custom_call.1} parent=0 // loop_header
    %s13 = sphi 0, %s17
    %p14 = scmp.ge.s32.totalorder %s13, 6
    %s23 = sphi 0, %s25
    %s26 = sphi 0, %s23
    %s27 = sphi 0, %s26
    %s43 = sphi 0, %s27
    %s47 = sphi 0, %s47
    %s49 = sphi 0, %s47
    %s50 = sphi 0, %s49
    %s64 = sphi 0, %s50
    %s68 = sphi 0, %s68
    %s70 = sphi 0, %s68
    %s71 = sphi 0, %s70
    %s85 = sphi 0, %s71
    %s89 = sphi 0, %s89
    %s91 = sphi 0, %s89
    %s92 = sphi 0, %s91
    %s106 = sphi 0, %s92
    %s110 = sphi 0, %s110
    %s112 = sphi 0, %s110
    %s113 = sphi 0, %s112
    %s127 = sphi 0, %s113
    %s133 = sphi 0, %s135
    %s136 = sphi 0, %s133
    %s137 = sphi 0, %s136
    %s153 = sphi 0, %s137
  $region4: #{tpu_custom_call.1} parent=0 // loop_header_branch
    %16 = sbr.rel (%p14) target = $region8
  $region5: #{tpu_custom_call.1} parent=0 // loop_body
    %s18 = ssub.s32 %s13, 1
    %s19 = ssub.s32 %s13, 2
    %s20 = sadd.s32 %s13, 1
    %s21 = ssub.s32 %s13, %s20
    %p22 = scmp.eq.s32.totalorder %s21, 0
    %s24 = sadd.s32 %s23, 1
    %s25 = scalar_select %p22, %s23, %s24
    %p28 = pneg %p22
    %p29 = scmp.eq.s32.totalorder %s13, 3
    %p30 = por %p28, %p29
    %p31 = scmp.ne.s32.totalorder %s23, %s26
    %p32 = scmp.eq.s32.totalorder %s13, 0
    %p33 = por %p31, %p32
    %p34 = scmp.ne.s32.totalorder %s23, %s26
    %p35 = scmp.eq.s32.totalorder %s18, 3
    %p36 = por %p34, %p35
    %p37 = scmp.ne.s32.totalorder %s26, %s27
    %p38 = scmp.eq.s32.totalorder %s18, 0
    %p39 = por %p37, %p38
    %p40 = scmp.ne.s32.totalorder %s26, %s27
    %p41 = scmp.eq.s32.totalorder %s19, 3
    %p42 = por %p40, %p41
    %p44 = scmp.ne.s32.totalorder %s27, %s43
    %p45 = scmp.eq.s32.totalorder %s19, 0
    %p46 = por %p44, %p45
    %s48 = sadd.s32 %s47, 1
    %p51 = scmp.eq.s32.totalorder %s13, 3
    %p52 = scmp.ne.s32.totalorder %s47, %s49
    %p53 = scmp.eq.s32.totalorder %s13, 0
    %p54 = por %p52, %p53
    %p55 = scmp.ne.s32.totalorder %s47, %s49
    %p56 = scmp.eq.s32.totalorder %s18, 3
    %p57 = por %p55, %p56
    %p58 = scmp.ne.s32.totalorder %s49, %s50
    %p59 = scmp.eq.s32.totalorder %s18, 0
    %p60 = por %p58, %p59
    %p61 = scmp.ne.s32.totalorder %s49, %s50
    %p62 = scmp.eq.s32.totalorder %s19, 3
    %p63 = por %p61, %p62
    %p65 = scmp.ne.s32.totalorder %s50, %s64
    %p66 = scmp.eq.s32.totalorder %s19, 0
    %p67 = por %p65, %p66
    %s69 = sadd.s32 %s68, 1
    %p72 = scmp.eq.s32.totalorder %s13, 3
    %p73 = scmp.ne.s32.totalorder %s68, %s70
    %p74 = scmp.eq.s32.totalorder %s13, 0
    %p75 = por %p73, %p74
    %p76 = scmp.ne.s32.totalorder %s68, %s70
    %p77 = scmp.eq.s32.totalorder %s18, 3
    %p78 = por %p76, %p77
    %p79 = scmp.ne.s32.totalorder %s70, %s71
    %p80 = scmp.eq.s32.totalorder %s18, 0
    %p81 = por %p79, %p80
    %p82 = scmp.ne.s32.totalorder %s70, %s71
    %p83 = scmp.eq.s32.totalorder %s19, 3
    %p84 = por %p82, %p83
    %p86 = scmp.ne.s32.totalorder %s71, %s85
    %p87 = scmp.eq.s32.totalorder %s19, 0
    %p88 = por %p86, %p87
    %s90 = sadd.s32 %s89, 1
    %p93 = scmp.eq.s32.totalorder %s13, 3
    %p94 = scmp.ne.s32.totalorder %s89, %s91
    %p95 = scmp.eq.s32.totalorder %s13, 0
    %p96 = por %p94, %p95
    %p97 = scmp.ne.s32.totalorder %s89, %s91
    %p98 = scmp.eq.s32.totalorder %s18, 3
    %p99 = por %p97, %p98
    %p100 = scmp.ne.s32.totalorder %s91, %s92
    %p101 = scmp.eq.s32.totalorder %s18, 0
    %p102 = por %p100, %p101
    %p103 = scmp.ne.s32.totalorder %s91, %s92
    %p104 = scmp.eq.s32.totalorder %s19, 3
    %p105 = por %p103, %p104
    %p107 = scmp.ne.s32.totalorder %s92, %s106
    %p108 = scmp.eq.s32.totalorder %s19, 0
    %p109 = por %p107, %p108
    %s111 = sadd.s32 %s110, 1
    %p114 = scmp.eq.s32.totalorder %s13, 3
    %p115 = scmp.ne.s32.totalorder %s110, %s112
    %p116 = scmp.eq.s32.totalorder %s13, 0
    %p117 = por %p115, %p116
    %p118 = scmp.ne.s32.totalorder %s110, %s112
    %p119 = scmp.eq.s32.totalorder %s18, 3
    %p120 = por %p118, %p119
    %p121 = scmp.ne.s32.totalorder %s112, %s113
    %p122 = scmp.eq.s32.totalorder %s18, 0
    %p123 = por %p121, %p122
    %p124 = scmp.ne.s32.totalorder %s112, %s113
    %p125 = scmp.eq.s32.totalorder %s19, 3
    %p126 = por %p124, %p125
    %p128 = scmp.ne.s32.totalorder %s113, %s127
    %p129 = scmp.eq.s32.totalorder %s19, 0
    %p130 = por %p128, %p129
    %s131 = ssub.s32 %s13, %s20
    %p132 = scmp.eq.s32.totalorder %s131, 0
    %s134 = sadd.s32 %s133, 1
    %s135 = scalar_select %p132, %s133, %s134
    %p138 = pneg %p132
    %p139 = scmp.eq.s32.totalorder %s13, 3
    %p140 = por %p138, %p139
    %p141 = scmp.ne.s32.totalorder %s133, %s136
    %p142 = scmp.eq.s32.totalorder %s13, 0
    %p143 = por %p141, %p142
    %p144 = scmp.ne.s32.totalorder %s133, %s136
    %p145 = scmp.eq.s32.totalorder %s18, 3
    %p146 = por %p144, %p145
    %p147 = scmp.ne.s32.totalorder %s136, %s137
    %p148 = scmp.eq.s32.totalorder %s18, 0
    %p149 = por %p147, %p148
    %p150 = scmp.ne.s32.totalorder %s136, %s137
    %p151 = scmp.eq.s32.totalorder %s19, 3
    %p152 = por %p150, %p151
    %p154 = scmp.ne.s32.totalorder %s137, %s153
    %p155 = scmp.eq.s32.totalorder %s19, 0
    %p156 = por %p154, %p155
    %p157 = scmp.le.s32.totalorder 1, %s13
    %p158 = scmp.lt.s32.totalorder %s13, 5
    %p159 = pnand %p157, %p158
    %p160 = pneg %p159
    // Predicated region
    $region9: #{tpu_custom_call.1} parent=5 // pred_check
      _
    $region10: #{tpu_custom_call.1} parent=5 // pred_check_branch
      %162 = sbr.rel (%p159) target = $region12
    $region11: #{tpu_custom_call.1} parent=5 // pred_region
      %s163 = ssub.s32 %s13, 1
      // Predicated region
      $region13: #{tpu_custom_call.1} parent=11 // pred_check
        %p164 = pneg %p60
      $region14: #{tpu_custom_call.1} parent=11 // pred_check_branch
        %166 = sbr.rel (%p164) target = $region16
      $region15: #{tpu_custom_call.1} parent=11 // pred_region
        _
      $region16: #{tpu_custom_call.1} parent=11 // pred_fallthru
        _
      // Predicated region
      $region17: #{tpu_custom_call.1} parent=11 // pred_check
        %p167 = pneg %p81
      $region18: #{tpu_custom_call.1} parent=11 // pred_check_branch
        %169 = sbr.rel (%p167) target = $region20
      $region19: #{tpu_custom_call.1} parent=11 // pred_region
        _
      $region20: #{tpu_custom_call.1} parent=11 // pred_fallthru
        _
      // Predicated region
      $region21: #{tpu_custom_call.1} parent=11 // pred_check
        %p170 = pneg %p102
      $region22: #{tpu_custom_call.1} parent=11 // pred_check_branch
        %172 = sbr.rel (%p170) target = $region24
      $region23: #{tpu_custom_call.1} parent=11 // pred_region
        _
      $region24: #{tpu_custom_call.1} parent=11 // pred_fallthru
        _
      // Predicated region
      $region25: #{tpu_custom_call.1} parent=11 // pred_check
        %p173 = pneg %p123
      $region26: #{tpu_custom_call.1} parent=11 // pred_check_branch
        %175 = sbr.rel (%p173) target = $region28
      $region27: #{tpu_custom_call.1} parent=11 // pred_region
        _
      $region28: #{tpu_custom_call.1} parent=11 // pred_fallthru
        _
    $region12: #{tpu_custom_call.1} parent=5 // pred_fallthru
      _
    %p176 = scmp.lt.s32.totalorder %s13, 4
    // Predicated region
    $region29: #{tpu_custom_call.1} parent=5 // pred_check
      %p177 = pneg %p176
    $region30: #{tpu_custom_call.1} parent=5 // pred_check_branch
      %179 = sbr.rel (%p177) target = $region32
    $region31: #{tpu_custom_call.1} parent=5 // pred_region
      // Predicated region
      $region33: #{tpu_custom_call.1} parent=31 // pred_check
        %p180 = pneg %p33
      $region34: #{tpu_custom_call.1} parent=31 // pred_check_branch
        %182 = sbr.rel (%p180) target = $region36
      $region35: #{tpu_custom_call.1} parent=31 // pred_region
        %s183 = smul.u32 64, %s13
        %p184 = scmp.lt.s32.totalorder %s183, 255
        %s185 = scalar_select %p184, %s183, 255
        %s186 = smul.addr %s185, 8
        %s187 = scalar_lea.vmem %s0, %s186
        %s188 = smul.u32 64, %s13
      $region36: #{tpu_custom_call.1} parent=31 // pred_fallthru
        _
    $region32: #{tpu_custom_call.1} parent=5 // pred_fallthru
      _
    %p189 = scmp.le.s32.totalorder 1, %s13
    %p190 = scmp.lt.s32.totalorder %s13, 5
    %p191 = pnand %p189, %p190
    %p192 = pneg %p191
    // Predicated region
    $region37: #{tpu_custom_call.1} parent=5 // pred_check
      _
    $region38: #{tpu_custom_call.1} parent=5 // pred_check_branch
      %194 = sbr.rel (%p191) target = $region40
    $region39: #{tpu_custom_call.1} parent=5 // pred_region
      %s195 = ssub.s32 %s13, 1
      %s196 = smul.u32 64, %s18
      %p197 = scmp.lt.s32.totalorder %s196, 255
      %s198 = scalar_select %p197, %s196, 255
      %s199 = smul.addr %s198, 8
      %s200 = scalar_lea.vmem %s0, %s199
      %p201 = pneg %p39
      %p202 = pneg %p36
      %p203 = pneg %p60
      %p204 = pneg %p57
      %p205 = pneg %p81
      %p206 = pneg %p78
      %p207 = pneg %p102
      %p208 = pneg %p99
      %p209 = pneg %p123
      %p210 = pneg %p120
      %p211 = pneg %p149
      %p212 = pneg %p146
      %s213 = smul.u32 64, %s18
      %p214 = scmp.lt.s32.totalorder %s213, 255
      %s215 = scalar_select %p214, %s213, 255
      %s216 = smul.addr %s215, 8
      %s217 = scalar_lea.vmem %s5, %s216
      %s218 = smul.u32 64, %s18
      %p219 = scmp.lt.s32.totalorder %s218, 255
      %s220 = scalar_select %p219, %s218, 255
      %s221 = smul.addr %s220, 8
      %s222 = scalar_lea.vmem %s0, %s221
      %s223 = smul.u32 64, %s18
      %s224 = smul.u32 64, %s18
      %p225 = scmp.lt.s32.totalorder %s224, 255
      %s226 = scalar_select %p225, %s224, 255
      %s227 = smul.addr %s226, 8
      %s228 = scalar_lea.vmem %s5, %s227
      %s229 = smul.u32 64, %s18
      %v230 = vld [vmem:[%s222] sm:$0xff]
      %v231 = vld [vmem:[%s222 + $0x8] sm:$0xff]
      %v232 = vld [vmem:[%s222 + $0x10] sm:$0xff]
      %v233 = vld [vmem:[%s222 + $0x18] sm:$0xff]
      %v234 = vld [vmem:[%s222 + $0x20] sm:$0xff]
      %v235 = vld [vmem:[%s222 + $0x28] sm:$0xff]
      %v236 = vld [vmem:[%s222 + $0x30] sm:$0xff]
      %v237 = vld [vmem:[%s222 + $0x38] sm:$0xff]
      %v238 = vld [vmem:[%s222 + $0x40] sm:$0xff]
      %v239 = vld [vmem:[%s222 + $0x48] sm:$0xff]
      %v240 = vld [vmem:[%s222 + $0x50] sm:$0xff]
      %v241 = vld [vmem:[%s222 + $0x58] sm:$0xff]
      %v242 = vld [vmem:[%s222 + $0x60] sm:$0xff]
      %v243 = vld [vmem:[%s222 + $0x68] sm:$0xff]
      %v244 = vld [vmem:[%s222 + $0x70] sm:$0xff]
      %v245 = vld [vmem:[%s222 + $0x78] sm:$0xff]
      %v246 = vld [vmem:[%s222 + $0x80] sm:$0xff]
      %v247 = vld [vmem:[%s222 + $0x88] sm:$0xff]
      %v248 = vld [vmem:[%s222 + $0x90] sm:$0xff]
      %v249 = vld [vmem:[%s222 + $0x98] sm:$0xff]
      %v250 = vld [vmem:[%s222 + $0xa0] sm:$0xff]
      %v251 = vld [vmem:[%s222 + $0xa8] sm:$0xff]
      %v252 = vld [vmem:[%s222 + $0xb0] sm:$0xff]
      %v253 = vld [vmem:[%s222 + $0xb8] sm:$0xff]
      %v254 = vld [vmem:[%s222 + $0xc0] sm:$0xff]
      %v255 = vld [vmem:[%s222 + $0xc8] sm:$0xff]
      %v256 = vld [vmem:[%s222 + $0xd0] sm:$0xff]
      %v257 = vld [vmem:[%s222 + $0xd8] sm:$0xff]
      %v258 = vld [vmem:[%s222 + $0xe0] sm:$0xff]
      %v259 = vld [vmem:[%s222 + $0xe8] sm:$0xff]
      %v260 = vld [vmem:[%s222 + $0xf0] sm:$0xff]
      %v261 = vld [vmem:[%s222 + $0xf8] sm:$0xff]
      %v262 = vld [vmem:[%s222 + $0x100] sm:$0xff]
      %v263 = vld [vmem:[%s222 + $0x108] sm:$0xff]
      %v264 = vld [vmem:[%s222 + $0x110] sm:$0xff]
      %v265 = vld [vmem:[%s222 + $0x118] sm:$0xff]
      %v266 = vld [vmem:[%s222 + $0x120] sm:$0xff]
      %v267 = vld [vmem:[%s222 + $0x128] sm:$0xff]
      %v268 = vld [vmem:[%s222 + $0x130] sm:$0xff]
      %v269 = vld [vmem:[%s222 + $0x138] sm:$0xff]
      %v270 = vld [vmem:[%s222 + $0x140] sm:$0xff]
      %v271 = vld [vmem:[%s222 + $0x148] sm:$0xff]
      %v272 = vld [vmem:[%s222 + $0x150] sm:$0xff]
      %v273 = vld [vmem:[%s222 + $0x158] sm:$0xff]
      %v274 = vld [vmem:[%s222 + $0x160] sm:$0xff]
      %v275 = vld [vmem:[%s222 + $0x168] sm:$0xff]
      %v276 = vld [vmem:[%s222 + $0x170] sm:$0xff]
      %v277 = vld [vmem:[%s222 + $0x178] sm:$0xff]
      %v278 = vld [vmem:[%s222 + $0x180] sm:$0xff]
      %v279 = vld [vmem:[%s222 + $0x188] sm:$0xff]
      %v280 = vld [vmem:[%s222 + $0x190] sm:$0xff]
      %v281 = vld [vmem:[%s222 + $0x198] sm:$0xff]
      %v282 = vld [vmem:[%s222 + $0x1a0] sm:$0xff]
      %v283 = vld [vmem:[%s222 + $0x1a8] sm:$0xff]
      %v284 = vld [vmem:[%s222 + $0x1b0] sm:$0xff]
      %v285 = vld [vmem:[%s222 + $0x1b8] sm:$0xff]
      %v286 = vld [vmem:[%s222 + $0x1c0] sm:$0xff]
      %v287 = vld [vmem:[%s222 + $0x1c8] sm:$0xff]
      %v288 = vld [vmem:[%s222 + $0x1d0] sm:$0xff]
      %v289 = vld [vmem:[%s222 + $0x1d8] sm:$0xff]
      %v290 = vld [vmem:[%s222 + $0x1e0] sm:$0xff]
      %v291 = vld [vmem:[%s222 + $0x1e8] sm:$0xff]
      %v292 = vld [vmem:[%s222 + $0x1f0] sm:$0xff]
      %v293 = vld [vmem:[%s222 + $0x1f8] sm:$0xff]
      %v294 = vld [vmem:[%s1] sm:$0x1]
      %296 = vset.pattern.permute.xlu0 0
      %297 = vperm.xlu0 %296, %v230
      %v298 = vpop.permute.xlu0 %297
      %301 = vset.pattern.permute.xlu0 0
      %302 = vperm.xlu0 %301, %v231
      %v303 = vpop.permute.xlu0 %302
      %306 = vset.pattern.permute.xlu0 0
      %307 = vperm.xlu0 %306, %v232
      %v308 = vpop.permute.xlu0 %307
      %311 = vset.pattern.permute.xlu0 0
      %312 = vperm.xlu0 %311, %v233
      %v313 = vpop.permute.xlu0 %312
      %316 = vset.pattern.permute.xlu0 0
      %317 = vperm.xlu0 %316, %v234
      %v318 = vpop.permute.xlu0 %317
      %321 = vset.pattern.permute.xlu0 0
      %322 = vperm.xlu0 %321, %v235
      %v323 = vpop.permute.xlu0 %322
      %326 = vset.pattern.permute.xlu0 0
      %327 = vperm.xlu0 %326, %v236
      %v328 = vpop.permute.xlu0 %327
      %331 = vset.pattern.permute.xlu0 0
      %332 = vperm.xlu0 %331, %v237
      %v333 = vpop.permute.xlu0 %332
      %336 = vset.pattern.permute.xlu0 0
      %337 = vperm.xlu0 %336, %v238
      %v338 = vpop.permute.xlu0 %337
      %341 = vset.pattern.permute.xlu0 0
      %342 = vperm.xlu0 %341, %v239
      %v343 = vpop.permute.xlu0 %342
      %346 = vset.pattern.permute.xlu0 0
      %347 = vperm.xlu0 %346, %v240
      %v348 = vpop.permute.xlu0 %347
      %351 = vset.pattern.permute.xlu0 0
      %352 = vperm.xlu0 %351, %v241
      %v353 = vpop.permute.xlu0 %352
      %356 = vset.pattern.permute.xlu0 0
      %357 = vperm.xlu0 %356, %v242
      %v358 = vpop.permute.xlu0 %357
      %361 = vset.pattern.permute.xlu0 0
      %362 = vperm.xlu0 %361, %v243
      %v363 = vpop.permute.xlu0 %362
      %366 = vset.pattern.permute.xlu0 0
      %367 = vperm.xlu0 %366, %v244
      %v368 = vpop.permute.xlu0 %367
      %371 = vset.pattern.permute.xlu0 0
      %372 = vperm.xlu0 %371, %v245
      %v373 = vpop.permute.xlu0 %372
      %376 = vset.pattern.permute.xlu0 0
      %377 = vperm.xlu0 %376, %v246
      %v378 = vpop.permute.xlu0 %377
      %381 = vset.pattern.permute.xlu0 0
      %382 = vperm.xlu0 %381, %v247
      %v383 = vpop.permute.xlu0 %382
      %386 = vset.pattern.permute.xlu0 0
      %387 = vperm.xlu0 %386, %v248
      %v388 = vpop.permute.xlu0 %387
      %391 = vset.pattern.permute.xlu0 0
      %392 = vperm.xlu0 %391, %v249
      %v393 = vpop.permute.xlu0 %392
      %396 = vset.pattern.permute.xlu0 0
      %397 = vperm.xlu0 %396, %v250
      %v398 = vpop.permute.xlu0 %397
      %401 = vset.pattern.permute.xlu0 0
      %402 = vperm.xlu0 %401, %v251
      %v403 = vpop.permute.xlu0 %402
      %406 = vset.pattern.permute.xlu0 0
      %407 = vperm.xlu0 %406, %v252
      %v408 = vpop.permute.xlu0 %407
      %411 = vset.pattern.permute.xlu0 0
      %412 = vperm.xlu0 %411, %v253
      %v413 = vpop.permute.xlu0 %412
      %416 = vset.pattern.permute.xlu0 0
      %417 = vperm.xlu0 %416, %v254
      %v418 = vpop.permute.xlu0 %417
      %421 = vset.pattern.permute.xlu0 0
      %422 = vperm.xlu0 %421, %v255
      %v423 = vpop.permute.xlu0 %422
      %426 = vset.pattern.permute.xlu0 0
      %427 = vperm.xlu0 %426, %v256
      %v428 = vpop.permute.xlu0 %427
      %431 = vset.pattern.permute.xlu0 0
      %432 = vperm.xlu0 %431, %v257
      %v433 = vpop.permute.xlu0 %432
      %436 = vset.pattern.permute.xlu0 0
      %437 = vperm.xlu0 %436, %v258
      %v438 = vpop.permute.xlu0 %437
      %441 = vset.pattern.permute.xlu0 0
      %442 = vperm.xlu0 %441, %v259
      %v443 = vpop.permute.xlu0 %442
      %446 = vset.pattern.permute.xlu0 0
      %447 = vperm.xlu0 %446, %v260
      %v448 = vpop.permute.xlu0 %447
      %451 = vset.pattern.permute.xlu0 0
      %452 = vperm.xlu0 %451, %v261
      %v453 = vpop.permute.xlu0 %452
      %456 = vset.pattern.permute.xlu0 0
      %457 = vperm.xlu0 %456, %v262
      %v458 = vpop.permute.xlu0 %457
      %461 = vset.pattern.permute.xlu0 0
      %462 = vperm.xlu0 %461, %v263
      %v463 = vpop.permute.xlu0 %462
      %466 = vset.pattern.permute.xlu0 0
      %467 = vperm.xlu0 %466, %v264
      %v468 = vpop.permute.xlu0 %467
      %471 = vset.pattern.permute.xlu0 0
      %472 = vperm.xlu0 %471, %v265
      %v473 = vpop.permute.xlu0 %472
      %476 = vset.pattern.permute.xlu0 0
      %477 = vperm.xlu0 %476, %v266
      %v478 = vpop.permute.xlu0 %477
      %481 = vset.pattern.permute.xlu0 0
      %482 = vperm.xlu0 %481, %v267
      %v483 = vpop.permute.xlu0 %482
      %486 = vset.pattern.permute.xlu0 0
      %487 = vperm.xlu0 %486, %v268
      %v488 = vpop.permute.xlu0 %487
      %491 = vset.pattern.permute.xlu0 0
      %492 = vperm.xlu0 %491, %v269
      %v493 = vpop.permute.xlu0 %492
      %496 = vset.pattern.permute.xlu0 0
      %497 = vperm.xlu0 %496, %v270
      %v498 = vpop.permute.xlu0 %497
      %501 = vset.pattern.permute.xlu0 0
      %502 = vperm.xlu0 %501, %v271
      %v503 = vpop.permute.xlu0 %502
      %506 = vset.pattern.permute.xlu0 0
      %507 = vperm.xlu0 %506, %v272
      %v508 = vpop.permute.xlu0 %507
      %511 = vset.pattern.permute.xlu0 0
      %512 = vperm.xlu0 %511, %v273
      %v513 = vpop.permute.xlu0 %512
      %516 = vset.pattern.permute.xlu0 0
      %517 = vperm.xlu0 %516, %v274
      %v518 = vpop.permute.xlu0 %517
      %521 = vset.pattern.permute.xlu0 0
      %522 = vperm.xlu0 %521, %v275
      %v523 = vpop.permute.xlu0 %522
      %526 = vset.pattern.permute.xlu0 0
      %527 = vperm.xlu0 %526, %v276
      %v528 = vpop.permute.xlu0 %527
      %531 = vset.pattern.permute.xlu0 0
      %532 = vperm.xlu0 %531, %v277
      %v533 = vpop.permute.xlu0 %532
      %536 = vset.pattern.permute.xlu0 0
      %537 = vperm.xlu0 %536, %v278
      %v538 = vpop.permute.xlu0 %537
      %541 = vset.pattern.permute.xlu0 0
      %542 = vperm.xlu0 %541, %v279
      %v543 = vpop.permute.xlu0 %542
      %546 = vset.pattern.permute.xlu0 0
      %547 = vperm.xlu0 %546, %v280
      %v548 = vpop.permute.xlu0 %547
      %551 = vset.pattern.permute.xlu0 0
      %552 = vperm.xlu0 %551, %v281
      %v553 = vpop.permute.xlu0 %552
      %556 = vset.pattern.permute.xlu0 0
      %557 = vperm.xlu0 %556, %v282
      %v558 = vpop.permute.xlu0 %557
      %561 = vset.pattern.permute.xlu0 0
      %562 = vperm.xlu0 %561, %v283
      %v563 = vpop.permute.xlu0 %562
      %566 = vset.pattern.permute.xlu0 0
      %567 = vperm.xlu0 %566, %v284
      %v568 = vpop.permute.xlu0 %567
      %571 = vset.pattern.permute.xlu0 0
      %572 = vperm.xlu0 %571, %v285
      %v573 = vpop.permute.xlu0 %572
      %576 = vset.pattern.permute.xlu0 0
      %577 = vperm.xlu0 %576, %v286
      %v578 = vpop.permute.xlu0 %577
      %581 = vset.pattern.permute.xlu0 0
      %582 = vperm.xlu0 %581, %v287
      %v583 = vpop.permute.xlu0 %582
      %586 = vset.pattern.permute.xlu0 0
      %587 = vperm.xlu0 %586, %v288
      %v588 = vpop.permute.xlu0 %587
      %591 = vset.pattern.permute.xlu0 0
      %592 = vperm.xlu0 %591, %v289
      %v593 = vpop.permute.xlu0 %592
      %596 = vset.pattern.permute.xlu0 0
      %597 = vperm.xlu0 %596, %v290
      %v598 = vpop.permute.xlu0 %597
      %601 = vset.pattern.permute.xlu0 0
      %602 = vperm.xlu0 %601, %v291
      %v603 = vpop.permute.xlu0 %602
      %606 = vset.pattern.permute.xlu0 0
      %607 = vperm.xlu0 %606, %v292
      %v608 = vpop.permute.xlu0 %607
      %611 = vset.pattern.permute.xlu0 0
      %612 = vperm.xlu0 %611, %v293
      %v613 = vpop.permute.xlu0 %612
      %v615 = vlaneseq
      %v616 = vshrl.u32 %v615, 7
      %v617 = vsub.s32 0, %v616
      %v618 = vrot.slane %v294, %v617
      %v619 = vmul.f32 %v298, %v618
      %v620 = vmul.f32 %v303, %v618
      %v621 = vmul.f32 %v308, %v618
      %v622 = vmul.f32 %v313, %v618
      %v623 = vmul.f32 %v318, %v618
      %v624 = vmul.f32 %v323, %v618
      %v625 = vmul.f32 %v328, %v618
      %v626 = vmul.f32 %v333, %v618
      %v627 = vmul.f32 %v338, %v618
      %v628 = vmul.f32 %v343, %v618
      %v629 = vmul.f32 %v348, %v618
      %v630 = vmul.f32 %v353, %v618
      %v631 = vmul.f32 %v358, %v618
      %v632 = vmul.f32 %v363, %v618
      %v633 = vmul.f32 %v368, %v618
      %v634 = vmul.f32 %v373, %v618
      %v635 = vmul.f32 %v378, %v618
      %v636 = vmul.f32 %v383, %v618
      %v637 = vmul.f32 %v388, %v618
      %v638 = vmul.f32 %v393, %v618
      %v639 = vmul.f32 %v398, %v618
      %v640 = vmul.f32 %v403, %v618
      %v641 = vmul.f32 %v408, %v618
      %v642 = vmul.f32 %v413, %v618
      %v643 = vmul.f32 %v418, %v618
      %v644 = vmul.f32 %v423, %v618
      %v645 = vmul.f32 %v428, %v618
      %v646 = vmul.f32 %v433, %v618
      %v647 = vmul.f32 %v438, %v618
      %v648 = vmul.f32 %v443, %v618
      %v649 = vmul.f32 %v448, %v618
      %v650 = vmul.f32 %v453, %v618
      %v651 = vmul.f32 %v458, %v618
      %v652 = vmul.f32 %v463, %v618
      %v653 = vmul.f32 %v468, %v618
      %v654 = vmul.f32 %v473, %v618
      %v655 = vmul.f32 %v478, %v618
      %v656 = vmul.f32 %v483, %v618
      %v657 = vmul.f32 %v488, %v618
      %v658 = vmul.f32 %v493, %v618
      %v659 = vmul.f32 %v498, %v618
      %v660 = vmul.f32 %v503, %v618
      %v661 = vmul.f32 %v508, %v618
      %v662 = vmul.f32 %v513, %v618
      %v663 = vmul.f32 %v518, %v618
      %v664 = vmul.f32 %v523, %v618
      %v665 = vmul.f32 %v528, %v618
      %v666 = vmul.f32 %v533, %v618
      %v667 = vmul.f32 %v538, %v618
      %v668 = vmul.f32 %v543, %v618
      %v669 = vmul.f32 %v548, %v618
      %v670 = vmul.f32 %v553, %v618
      %v671 = vmul.f32 %v558, %v618
      %v672 = vmul.f32 %v563, %v618
      %v673 = vmul.f32 %v568, %v618
      %v674 = vmul.f32 %v573, %v618
      %v675 = vmul.f32 %v578, %v618
      %v676 = vmul.f32 %v583, %v618
      %v677 = vmul.f32 %v588, %v618
      %v678 = vmul.f32 %v593, %v618
      %v679 = vmul.f32 %v598, %v618
      %v680 = vmul.f32 %v603, %v618
      %v681 = vmul.f32 %v608, %v618
      %v682 = vmul.f32 %v613, %v618
      %v683 = vld [vmem:[%s1 + $0x1] sm:$0x1]
      %684 = vset.pattern.permute.xlu0 1
      %685 = vperm.xlu0 %684, %v230
      %v686 = vpop.permute.xlu0 %685
      %688 = vset.pattern.permute.xlu0 1
      %689 = vperm.xlu0 %688, %v231
      %v690 = vpop.permute.xlu0 %689
      %692 = vset.pattern.permute.xlu0 1
      %693 = vperm.xlu0 %692, %v232
      %v694 = vpop.permute.xlu0 %693
      %696 = vset.pattern.permute.xlu0 1
      %697 = vperm.xlu0 %696, %v233
      %v698 = vpop.permute.xlu0 %697
      %700 = vset.pattern.permute.xlu0 1
      %701 = vperm.xlu0 %700, %v234
      %v702 = vpop.permute.xlu0 %701
      %704 = vset.pattern.permute.xlu0 1
      %705 = vperm.xlu0 %704, %v235
      %v706 = vpop.permute.xlu0 %705
      %708 = vset.pattern.permute.xlu0 1
      %709 = vperm.xlu0 %708, %v236
      %v710 = vpop.permute.xlu0 %709
      %712 = vset.pattern.permute.xlu0 1
      %713 = vperm.xlu0 %712, %v237
      %v714 = vpop.permute.xlu0 %713
      %716 = vset.pattern.permute.xlu0 1
      %717 = vperm.xlu0 %716, %v238
      %v718 = vpop.permute.xlu0 %717
      %720 = vset.pattern.permute.xlu0 1
      %721 = vperm.xlu0 %720, %v239
      %v722 = vpop.permute.xlu0 %721
      %724 = vset.pattern.permute.xlu0 1
      %725 = vperm.xlu0 %724, %v240
      %v726 = vpop.permute.xlu0 %725
      %728 = vset.pattern.permute.xlu0 1
      %729 = vperm.xlu0 %728, %v241
      %v730 = vpop.permute.xlu0 %729
      %732 = vset.pattern.permute.xlu0 1
      %733 = vperm.xlu0 %732, %v242
      %v734 = vpop.permute.xlu0 %733
      %736 = vset.pattern.permute.xlu0 1
      %737 = vperm.xlu0 %736, %v243
      %v738 = vpop.permute.xlu0 %737
      %740 = vset.pattern.permute.xlu0 1
      %741 = vperm.xlu0 %740, %v244
      %v742 = vpop.permute.xlu0 %741
      %744 = vset.pattern.permute.xlu0 1
      %745 = vperm.xlu0 %744, %v245
      %v746 = vpop.permute.xlu0 %745
      %748 = vset.pattern.permute.xlu0 1
      %749 = vperm.xlu0 %748, %v246
      %v750 = vpop.permute.xlu0 %749
      %752 = vset.pattern.permute.xlu0 1
      %753 = vperm.xlu0 %752, %v247
      %v754 = vpop.permute.xlu0 %753
      %756 = vset.pattern.permute.xlu0 1
      %757 = vperm.xlu0 %756, %v248
      %v758 = vpop.permute.xlu0 %757
      %760 = vset.pattern.permute.xlu0 1
      %761 = vperm.xlu0 %760, %v249
      %v762 = vpop.permute.xlu0 %761
      %764 = vset.pattern.permute.xlu0 1
      %765 = vperm.xlu0 %764, %v250
      %v766 = vpop.permute.xlu0 %765
      %768 = vset.pattern.permute.xlu0 1
      %769 = vperm.xlu0 %768, %v251
      %v770 = vpop.permute.xlu0 %769
      %772 = vset.pattern.permute.xlu0 1
      %773 = vperm.xlu0 %772, %v252
      %v774 = vpop.permute.xlu0 %773
      %776 = vset.pattern.permute.xlu0 1
      %777 = vperm.xlu0 %776, %v253
      %v778 = vpop.permute.xlu0 %777
      %780 = vset.pattern.permute.xlu0 1
      %781 = vperm.xlu0 %780, %v254
      %v782 = vpop.permute.xlu0 %781
      %784 = vset.pattern.permute.xlu0 1
      %785 = vperm.xlu0 %784, %v255
      %v786 = vpop.permute.xlu0 %785
      %788 = vset.pattern.permute.xlu0 1
      %789 = vperm.xlu0 %788, %v256
      %v790 = vpop.permute.xlu0 %789
      %792 = vset.pattern.permute.xlu0 1
      %793 = vperm.xlu0 %792, %v257
      %v794 = vpop.permute.xlu0 %793
      %796 = vset.pattern.permute.xlu0 1
      %797 = vperm.xlu0 %796, %v258
      %v798 = vpop.permute.xlu0 %797
      %800 = vset.pattern.permute.xlu0 1
      %801 = vperm.xlu0 %800, %v259
      %v802 = vpop.permute.xlu0 %801
      %804 = vset.pattern.permute.xlu0 1
      %805 = vperm.xlu0 %804, %v260
      %v806 = vpop.permute.xlu0 %805
      %808 = vset.pattern.permute.xlu0 1
      %809 = vperm.xlu0 %808, %v261
      %v810 = vpop.permute.xlu0 %809
      %812 = vset.pattern.permute.xlu0 1
      %813 = vperm.xlu0 %812, %v262
      %v814 = vpop.permute.xlu0 %813
      %816 = vset.pattern.permute.xlu0 1
      %817 = vperm.xlu0 %816, %v263
      %v818 = vpop.permute.xlu0 %817
      %820 = vset.pattern.permute.xlu0 1
      %821 = vperm.xlu0 %820, %v264
      %v822 = vpop.permute.xlu0 %821
      %824 = vset.pattern.permute.xlu0 1
      %825 = vperm.xlu0 %824, %v265
      %v826 = vpop.permute.xlu0 %825
      %828 = vset.pattern.permute.xlu0 1
      %829 = vperm.xlu0 %828, %v266
      %v830 = vpop.permute.xlu0 %829
      %832 = vset.pattern.permute.xlu0 1
      %833 = vperm.xlu0 %832, %v267
      %v834 = vpop.permute.xlu0 %833
      %836 = vset.pattern.permute.xlu0 1
      %837 = vperm.xlu0 %836, %v268
      %v838 = vpop.permute.xlu0 %837
      %840 = vset.pattern.permute.xlu0 1
      %841 = vperm.xlu0 %840, %v269
      %v842 = vpop.permute.xlu0 %841
      %844 = vset.pattern.permute.xlu0 1
      %845 = vperm.xlu0 %844, %v270
      %v846 = vpop.permute.xlu0 %845
      %848 = vset.pattern.permute.xlu0 1
      %849 = vperm.xlu0 %848, %v271
      %v850 = vpop.permute.xlu0 %849
      %852 = vset.pattern.permute.xlu0 1
      %853 = vperm.xlu0 %852, %v272
      %v854 = vpop.permute.xlu0 %853
      %856 = vset.pattern.permute.xlu0 1
      %857 = vperm.xlu0 %856, %v273
      %v858 = vpop.permute.xlu0 %857
      %860 = vset.pattern.permute.xlu0 1
      %861 = vperm.xlu0 %860, %v274
      %v862 = vpop.permute.xlu0 %861
      %864 = vset.pattern.permute.xlu0 1
      %865 = vperm.xlu0 %864, %v275
      %v866 = vpop.permute.xlu0 %865
      %868 = vset.pattern.permute.xlu0 1
      %869 = vperm.xlu0 %868, %v276
      %v870 = vpop.permute.xlu0 %869
      %872 = vset.pattern.permute.xlu0 1
      %873 = vperm.xlu0 %872, %v277
      %v874 = vpop.permute.xlu0 %873
      %876 = vset.pattern.permute.xlu0 1
      %877 = vperm.xlu0 %876, %v278
      %v878 = vpop.permute.xlu0 %877
      %880 = vset.pattern.permute.xlu0 1
      %881 = vperm.xlu0 %880, %v279
      %v882 = vpop.permute.xlu0 %881
      %884 = vset.pattern.permute.xlu0 1
      %885 = vperm.xlu0 %884, %v280
      %v886 = vpop.permute.xlu0 %885
      %888 = vset.pattern.permute.xlu0 1
      %889 = vperm.xlu0 %888, %v281
      %v890 = vpop.permute.xlu0 %889
      %892 = vset.pattern.permute.xlu0 1
      %893 = vperm.xlu0 %892, %v282
      %v894 = vpop.permute.xlu0 %893
      %896 = vset.pattern.permute.xlu0 1
      %897 = vperm.xlu0 %896, %v283
      %v898 = vpop.permute.xlu0 %897
      %900 = vset.pattern.permute.xlu0 1
      %901 = vperm.xlu0 %900, %v284
      %v902 = vpop.permute.xlu0 %901
      %904 = vset.pattern.permute.xlu0 1
      %905 = vperm.xlu0 %904, %v285
      %v906 = vpop.permute.xlu0 %905
      %908 = vset.pattern.permute.xlu0 1
      %909 = vperm.xlu0 %908, %v286
      %v910 = vpop.permute.xlu0 %909
      %912 = vset.pattern.permute.xlu0 1
      %913 = vperm.xlu0 %912, %v287
      %v914 = vpop.permute.xlu0 %913
      %916 = vset.pattern.permute.xlu0 1
      %917 = vperm.xlu0 %916, %v288
      %v918 = vpop.permute.xlu0 %917
      %920 = vset.pattern.permute.xlu0 1
      %921 = vperm.xlu0 %920, %v289
      %v922 = vpop.permute.xlu0 %921
      %924 = vset.pattern.permute.xlu0 1
      %925 = vperm.xlu0 %924, %v290
      %v926 = vpop.permute.xlu0 %925
      %928 = vset.pattern.permute.xlu0 1
      %929 = vperm.xlu0 %928, %v291
      %v930 = vpop.permute.xlu0 %929
      %932 = vset.pattern.permute.xlu0 1
      %933 = vperm.xlu0 %932, %v292
      %v934 = vpop.permute.xlu0 %933
      %936 = vset.pattern.permute.xlu0 1
      %937 = vperm.xlu0 %936, %v293
      %v938 = vpop.permute.xlu0 %937
      %v940 = vlaneseq
      %v941 = vshrl.u32 %v940, 7
      %v942 = vsub.s32 0, %v941
      %v943 = vrot.slane %v683, %v942
      %v944 = vmul.f32 %v686, %v943
      %v945 = vmul.f32 %v690, %v943
      %v946 = vmul.f32 %v694, %v943
      %v947 = vmul.f32 %v698, %v943
      %v948 = vmul.f32 %v702, %v943
      %v949 = vmul.f32 %v706, %v943
      %v950 = vmul.f32 %v710, %v943
      %v951 = vmul.f32 %v714, %v943
      %v952 = vmul.f32 %v718, %v943
      %v953 = vmul.f32 %v722, %v943
      %v954 = vmul.f32 %v726, %v943
      %v955 = vmul.f32 %v730, %v943
      %v956 = vmul.f32 %v734, %v943
      %v957 = vmul.f32 %v738, %v943
      %v958 = vmul.f32 %v742, %v943
      %v959 = vmul.f32 %v746, %v943
      %v960 = vmul.f32 %v750, %v943
      %v961 = vmul.f32 %v754, %v943
      %v962 = vmul.f32 %v758, %v943
      %v963 = vmul.f32 %v762, %v943
      %v964 = vmul.f32 %v766, %v943
      %v965 = vmul.f32 %v770, %v943
      %v966 = vmul.f32 %v774, %v943
      %v967 = vmul.f32 %v778, %v943
      %v968 = vmul.f32 %v782, %v943
      %v969 = vmul.f32 %v786, %v943
      %v970 = vmul.f32 %v790, %v943
      %v971 = vmul.f32 %v794, %v943
      %v972 = vmul.f32 %v798, %v943
      %v973 = vmul.f32 %v802, %v943
      %v974 = vmul.f32 %v806, %v943
      %v975 = vmul.f32 %v810, %v943
      %v976 = vmul.f32 %v814, %v943
      %v977 = vmul.f32 %v818, %v943
      %v978 = vmul.f32 %v822, %v943
      %v979 = vmul.f32 %v826, %v943
      %v980 = vmul.f32 %v830, %v943
      %v981 = vmul.f32 %v834, %v943
      %v982 = vmul.f32 %v838, %v943
      %v983 = vmul.f32 %v842, %v943
      %v984 = vmul.f32 %v846, %v943
      %v985 = vmul.f32 %v850, %v943
      %v986 = vmul.f32 %v854, %v943
      %v987 = vmul.f32 %v858, %v943
      %v988 = vmul.f32 %v862, %v943
      %v989 = vmul.f32 %v866, %v943
      %v990 = vmul.f32 %v870, %v943
      %v991 = vmul.f32 %v874, %v943
      %v992 = vmul.f32 %v878, %v943
      %v993 = vmul.f32 %v882, %v943
      %v994 = vmul.f32 %v886, %v943
      %v995 = vmul.f32 %v890, %v943
      %v996 = vmul.f32 %v894, %v943
      %v997 = vmul.f32 %v898, %v943
      %v998 = vmul.f32 %v902, %v943
      %v999 = vmul.f32 %v906, %v943
      %v1000 = vmul.f32 %v910, %v943
      %v1001 = vmul.f32 %v914, %v943
      %v1002 = vmul.f32 %v918, %v943
      %v1003 = vmul.f32 %v922, %v943
      %v1004 = vmul.f32 %v926, %v943
      %v1005 = vmul.f32 %v930, %v943
      %v1006 = vmul.f32 %v934, %v943
      %v1007 = vmul.f32 %v938, %v943
      %v1008 = vadd.f32 %v619, %v944
      %v1009 = vadd.f32 %v620, %v945
      %v1010 = vadd.f32 %v621, %v946
      %v1011 = vadd.f32 %v622, %v947
      %v1012 = vadd.f32 %v623, %v948
      %v1013 = vadd.f32 %v624, %v949
      %v1014 = vadd.f32 %v625, %v950
      %v1015 = vadd.f32 %v626, %v951
      %v1016 = vadd.f32 %v627, %v952
      %v1017 = vadd.f32 %v628, %v953
      %v1018 = vadd.f32 %v629, %v954
      %v1019 = vadd.f32 %v630, %v955
      %v1020 = vadd.f32 %v631, %v956
      %v1021 = vadd.f32 %v632, %v957
      %v1022 = vadd.f32 %v633, %v958
      %v1023 = vadd.f32 %v634, %v959
      %v1024 = vadd.f32 %v635, %v960
      %v1025 = vadd.f32 %v636, %v961
      %v1026 = vadd.f32 %v637, %v962
      %v1027 = vadd.f32 %v638, %v963
      %v1028 = vadd.f32 %v639, %v964
      %v1029 = vadd.f32 %v640, %v965
      %v1030 = vadd.f32 %v641, %v966
      %v1031 = vadd.f32 %v642, %v967
      %v1032 = vadd.f32 %v643, %v968
      %v1033 = vadd.f32 %v644, %v969
      %v1034 = vadd.f32 %v645, %v970
      %v1035 = vadd.f32 %v646, %v971
      %v1036 = vadd.f32 %v647, %v972
      %v1037 = vadd.f32 %v648, %v973
      %v1038 = vadd.f32 %v649, %v974
      %v1039 = vadd.f32 %v650, %v975
      %v1040 = vadd.f32 %v651, %v976
      %v1041 = vadd.f32 %v652, %v977
      %v1042 = vadd.f32 %v653, %v978
      %v1043 = vadd.f32 %v654, %v979
      %v1044 = vadd.f32 %v655, %v980
      %v1045 = vadd.f32 %v656, %v981
      %v1046 = vadd.f32 %v657, %v982
      %v1047 = vadd.f32 %v658, %v983
      %v1048 = vadd.f32 %v659, %v984
      %v1049 = vadd.f32 %v660, %v985
      %v1050 = vadd.f32 %v661, %v986
      %v1051 = vadd.f32 %v662, %v987
      %v1052 = vadd.f32 %v663, %v988
      %v1053 = vadd.f32 %v664, %v989
      %v1054 = vadd.f32 %v665, %v990
      %v1055 = vadd.f32 %v666, %v991
      %v1056 = vadd.f32 %v667, %v992
      %v1057 = vadd.f32 %v668, %v993
      %v1058 = vadd.f32 %v669, %v994
      %v1059 = vadd.f32 %v670, %v995
      %v1060 = vadd.f32 %v671, %v996
      %v1061 = vadd.f32 %v672, %v997
      %v1062 = vadd.f32 %v673, %v998
      %v1063 = vadd.f32 %v674, %v999
      %v1064 = vadd.f32 %v675, %v1000
      %v1065 = vadd.f32 %v676, %v1001
      %v1066 = vadd.f32 %v677, %v1002
      %v1067 = vadd.f32 %v678, %v1003
      %v1068 = vadd.f32 %v679, %v1004
      %v1069 = vadd.f32 %v680, %v1005
      %v1070 = vadd.f32 %v681, %v1006
      %v1071 = vadd.f32 %v682, %v1007
      %v1072 = vld [vmem:[%s2] sm:$0x1]
      %v1074 = vlaneseq
      %v1075 = vshrl.u32 %v1074, 7
      %v1076 = vsub.s32 0, %v1075
      %v1077 = vrot.slane %v1072, %v1076
      %v1079 = vadd.f32 %v1008, %v1077
      %v1080 = vadd.f32 %v1009, %v1077
      %v1081 = vadd.f32 %v1010, %v1077
      %v1082 = vadd.f32 %v1011, %v1077
      %v1083 = vadd.f32 %v1012, %v1077
      %v1084 = vadd.f32 %v1013, %v1077
      %v1085 = vadd.f32 %v1014, %v1077
      %v1086 = vadd.f32 %v1015, %v1077
      %v1087 = vadd.f32 %v1016, %v1077
      %v1088 = vadd.f32 %v1017, %v1077
      %v1089 = vadd.f32 %v1018, %v1077
      %v1090 = vadd.f32 %v1019, %v1077
      %v1091 = vadd.f32 %v1020, %v1077
      %v1092 = vadd.f32 %v1021, %v1077
      %v1093 = vadd.f32 %v1022, %v1077
      %v1094 = vadd.f32 %v1023, %v1077
      %v1095 = vadd.f32 %v1024, %v1077
      %v1096 = vadd.f32 %v1025, %v1077
      %v1097 = vadd.f32 %v1026, %v1077
      %v1098 = vadd.f32 %v1027, %v1077
      %v1099 = vadd.f32 %v1028, %v1077
      %v1100 = vadd.f32 %v1029, %v1077
      %v1101 = vadd.f32 %v1030, %v1077
      %v1102 = vadd.f32 %v1031, %v1077
      %v1103 = vadd.f32 %v1032, %v1077
      %v1104 = vadd.f32 %v1033, %v1077
      %v1105 = vadd.f32 %v1034, %v1077
      %v1106 = vadd.f32 %v1035, %v1077
      %v1107 = vadd.f32 %v1036, %v1077
      %v1108 = vadd.f32 %v1037, %v1077
      %v1109 = vadd.f32 %v1038, %v1077
      %v1110 = vadd.f32 %v1039, %v1077
      %v1111 = vadd.f32 %v1040, %v1077
      %v1112 = vadd.f32 %v1041, %v1077
      %v1113 = vadd.f32 %v1042, %v1077
      %v1114 = vadd.f32 %v1043, %v1077
      %v1115 = vadd.f32 %v1044, %v1077
      %v1116 = vadd.f32 %v1045, %v1077
      %v1117 = vadd.f32 %v1046, %v1077
      %v1118 = vadd.f32 %v1047, %v1077
      %v1119 = vadd.f32 %v1048, %v1077
      %v1120 = vadd.f32 %v1049, %v1077
      %v1121 = vadd.f32 %v1050, %v1077
      %v1122 = vadd.f32 %v1051, %v1077
      %v1123 = vadd.f32 %v1052, %v1077
      %v1124 = vadd.f32 %v1053, %v1077
      %v1125 = vadd.f32 %v1054, %v1077
      %v1126 = vadd.f32 %v1055, %v1077
      %v1127 = vadd.f32 %v1056, %v1077
      %v1128 = vadd.f32 %v1057, %v1077
      %v1129 = vadd.f32 %v1058, %v1077
      %v1130 = vadd.f32 %v1059, %v1077
      %v1131 = vadd.f32 %v1060, %v1077
      %v1132 = vadd.f32 %v1061, %v1077
      %v1133 = vadd.f32 %v1062, %v1077
      %v1134 = vadd.f32 %v1063, %v1077
      %v1135 = vadd.f32 %v1064, %v1077
      %v1136 = vadd.f32 %v1065, %v1077
      %v1137 = vadd.f32 %v1066, %v1077
      %v1138 = vadd.f32 %v1067, %v1077
      %v1139 = vadd.f32 %v1068, %v1077
      %v1140 = vadd.f32 %v1069, %v1077
      %v1141 = vadd.f32 %v1070, %v1077
      %v1142 = vadd.f32 %v1071, %v1077
      %v1143 = vmax.f32 %v1079, 0.0
      %v1144 = vmax.f32 %v1080, 0.0
      %v1145 = vmax.f32 %v1081, 0.0
      %v1146 = vmax.f32 %v1082, 0.0
      %v1147 = vmax.f32 %v1083, 0.0
      %v1148 = vmax.f32 %v1084, 0.0
      %v1149 = vmax.f32 %v1085, 0.0
      %v1150 = vmax.f32 %v1086, 0.0
      %v1151 = vmax.f32 %v1087, 0.0
      %v1152 = vmax.f32 %v1088, 0.0
      %v1153 = vmax.f32 %v1089, 0.0
      %v1154 = vmax.f32 %v1090, 0.0
      %v1155 = vmax.f32 %v1091, 0.0
      %v1156 = vmax.f32 %v1092, 0.0
      %v1157 = vmax.f32 %v1093, 0.0
      %v1158 = vmax.f32 %v1094, 0.0
      %v1159 = vmax.f32 %v1095, 0.0
      %v1160 = vmax.f32 %v1096, 0.0
      %v1161 = vmax.f32 %v1097, 0.0
      %v1162 = vmax.f32 %v1098, 0.0
      %v1163 = vmax.f32 %v1099, 0.0
      %v1164 = vmax.f32 %v1100, 0.0
      %v1165 = vmax.f32 %v1101, 0.0
      %v1166 = vmax.f32 %v1102, 0.0
      %v1167 = vmax.f32 %v1103, 0.0
      %v1168 = vmax.f32 %v1104, 0.0
      %v1169 = vmax.f32 %v1105, 0.0
      %v1170 = vmax.f32 %v1106, 0.0
      %v1171 = vmax.f32 %v1107, 0.0
      %v1172 = vmax.f32 %v1108, 0.0
      %v1173 = vmax.f32 %v1109, 0.0
      %v1174 = vmax.f32 %v1110, 0.0
      %v1175 = vmax.f32 %v1111, 0.0
      %v1176 = vmax.f32 %v1112, 0.0
      %v1177 = vmax.f32 %v1113, 0.0
      %v1178 = vmax.f32 %v1114, 0.0
      %v1179 = vmax.f32 %v1115, 0.0
      %v1180 = vmax.f32 %v1116, 0.0
      %v1181 = vmax.f32 %v1117, 0.0
      %v1182 = vmax.f32 %v1118, 0.0
      %v1183 = vmax.f32 %v1119, 0.0
      %v1184 = vmax.f32 %v1120, 0.0
      %v1185 = vmax.f32 %v1121, 0.0
      %v1186 = vmax.f32 %v1122, 0.0
      %v1187 = vmax.f32 %v1123, 0.0
      %v1188 = vmax.f32 %v1124, 0.0
      %v1189 = vmax.f32 %v1125, 0.0
      %v1190 = vmax.f32 %v1126, 0.0
      %v1191 = vmax.f32 %v1127, 0.0
      %v1192 = vmax.f32 %v1128, 0.0
      %v1193 = vmax.f32 %v1129, 0.0
      %v1194 = vmax.f32 %v1130, 0.0
      %v1195 = vmax.f32 %v1131, 0.0
      %v1196 = vmax.f32 %v1132, 0.0
      %v1197 = vmax.f32 %v1133, 0.0
      %v1198 = vmax.f32 %v1134, 0.0
      %v1199 = vmax.f32 %v1135, 0.0
      %v1200 = vmax.f32 %v1136, 0.0
      %v1201 = vmax.f32 %v1137, 0.0
      %v1202 = vmax.f32 %v1138, 0.0
      %v1203 = vmax.f32 %v1139, 0.0
      %v1204 = vmax.f32 %v1140, 0.0
      %v1205 = vmax.f32 %v1141, 0.0
      %v1206 = vmax.f32 %v1142, 0.0
      %v1207 = vld [vmem:[%s3] sm:$0xff]
      %v1208 = vld [vmem:[%s3 + $0x8] sm:$0xff]
      %v1209 = vld [vmem:[%s3 + $0x10] sm:$0xff]
      %v1210 = vld [vmem:[%s3 + $0x18] sm:$0xff]
      %v1211 = vld [vmem:[%s3 + $0x20] sm:$0xff]
      %v1212 = vld [vmem:[%s3 + $0x28] sm:$0xff]
      %v1213 = vld [vmem:[%s3 + $0x30] sm:$0xff]
      %v1214 = vld [vmem:[%s3 + $0x38] sm:$0xff]
      %v1215 = vld [vmem:[%s3 + $0x40] sm:$0xff]
      %v1216 = vld [vmem:[%s3 + $0x48] sm:$0xff]
      %v1217 = vld [vmem:[%s3 + $0x50] sm:$0xff]
      %v1218 = vld [vmem:[%s3 + $0x58] sm:$0xff]
      %v1219 = vld [vmem:[%s3 + $0x60] sm:$0xf]
      %v1220 = vld [vmem:[#allocation2] sm:$0x1]
      %v1222 = vlaneseq
      %v1223 = vshrl.u32 %v1222, 7
      %v1224 = vsub.s32 0, %v1223
      %v1225 = vrot.slane %v1220, %v1224
      %vm1227 = vcmask 818176
      %v1229 = vsel %vm1227, %v1143, 0
      %v1232 = vsel %vm1227, %v1144, 0
      %v1235 = vsel %vm1227, %v1145, 0
      %v1238 = vsel %vm1227, %v1146, 0
      %v1241 = vsel %vm1227, %v1147, 0
      %v1244 = vsel %vm1227, %v1148, 0
      %v1247 = vsel %vm1227, %v1149, 0
      %v1250 = vsel %vm1227, %v1150, 0
      %v1253 = vsel %vm1227, %v1151, 0
      %v1256 = vsel %vm1227, %v1152, 0
      %v1259 = vsel %vm1227, %v1153, 0
      %v1262 = vsel %vm1227, %v1154, 0
      %v1265 = vsel %vm1227, %v1155, 0
      %v1268 = vsel %vm1227, %v1156, 0
      %v1271 = vsel %vm1227, %v1157, 0
      %v1274 = vsel %vm1227, %v1158, 0
      %v1277 = vsel %vm1227, %v1159, 0
      %v1280 = vsel %vm1227, %v1160, 0
      %v1283 = vsel %vm1227, %v1161, 0
      %v1286 = vsel %vm1227, %v1162, 0
      %v1289 = vsel %vm1227, %v1163, 0
      %v1292 = vsel %vm1227, %v1164, 0
      %v1295 = vsel %vm1227, %v1165, 0
      %v1298 = vsel %vm1227, %v1166, 0
      %v1301 = vsel %vm1227, %v1167, 0
      %v1304 = vsel %vm1227, %v1168, 0
      %v1307 = vsel %vm1227, %v1169, 0
      %v1310 = vsel %vm1227, %v1170, 0
      %v1313 = vsel %vm1227, %v1171, 0
      %v1316 = vsel %vm1227, %v1172, 0
      %v1319 = vsel %vm1227, %v1173, 0
      %v1322 = vsel %vm1227, %v1174, 0
      %v1325 = vsel %vm1227, %v1175, 0
      %v1328 = vsel %vm1227, %v1176, 0
      %v1331 = vsel %vm1227, %v1177, 0
      %v1334 = vsel %vm1227, %v1178, 0
      %v1337 = vsel %vm1227, %v1179, 0
      %v1340 = vsel %vm1227, %v1180, 0
      %v1343 = vsel %vm1227, %v1181, 0
      %v1346 = vsel %vm1227, %v1182, 0
      %v1349 = vsel %vm1227, %v1183, 0
      %v1352 = vsel %vm1227, %v1184, 0
      %v1355 = vsel %vm1227, %v1185, 0
      %v1358 = vsel %vm1227, %v1186, 0
      %v1361 = vsel %vm1227, %v1187, 0
      %v1364 = vsel %vm1227, %v1188, 0
      %v1367 = vsel %vm1227, %v1189, 0
      %v1370 = vsel %vm1227, %v1190, 0
      %v1373 = vsel %vm1227, %v1191, 0
      %v1376 = vsel %vm1227, %v1192, 0
      %v1379 = vsel %vm1227, %v1193, 0
      %v1382 = vsel %vm1227, %v1194, 0
      %v1385 = vsel %vm1227, %v1195, 0
      %v1388 = vsel %vm1227, %v1196, 0
      %v1391 = vsel %vm1227, %v1197, 0
      %v1394 = vsel %vm1227, %v1198, 0
      %v1397 = vsel %vm1227, %v1199, 0
      %v1400 = vsel %vm1227, %v1200, 0
      %v1403 = vsel %vm1227, %v1201, 0
      %v1406 = vsel %vm1227, %v1202, 0
      %v1409 = vsel %vm1227, %v1203, 0
      %v1412 = vsel %vm1227, %v1204, 0
      %v1415 = vsel %vm1227, %v1205, 0
      %v1418 = vsel %vm1227, %v1206, 0
      %vm1420 = vcmask 1043456
      %v1422 = vsel %vm1420, %v1219, 0
      %1424 = vmatprep.subr.mxu0 0.0
      %1425 = vmatpush1.msra.mxu0 %v1207
      %1426 = vmatprep.subr.mxu0 0.0
      %1427 = vmatpush1.msra.mxu0 %v1208
      %1428 = vmatprep.subr.mxu0 0.0
      %1429 = vmatpush1.msra.mxu0 %v1209
      %1430 = vmatprep.subr.mxu0 0.0
      %1431 = vmatpush1.msra.mxu0 %v1210
      %1432 = vmatprep.subr.mxu0 0.0
      %1433 = vmatpush1.msra.mxu0 %v1211
      %1434 = vmatprep.subr.mxu0 0.0
      %1435 = vmatpush1.msra.mxu0 %v1212
      %1436 = vmatprep.subr.mxu0 0.0
      %1437 = vmatpush1.msra.mxu0 %v1213
      %1438 = vmatprep.subr.mxu0 0.0
      %1439 = vmatpush1.msra.mxu0 %v1214
      %1440 = vmatprep.subr.mxu0 0.0
      %1441 = vmatpush1.msra.mxu0 %v1215
      %1442 = vmatprep.subr.mxu0 0.0
      %1443 = vmatpush1.msra.mxu0 %v1216
      %1444 = vmatprep.subr.mxu0 0.0
      %1445 = vmatpush1.msra.mxu0 %v1217
      %1446 = vmatprep.subr.mxu0 0.0
      %1447 = vmatpush1.msra.mxu0 %v1218
      %1448 = vmatprep.subr.mxu0 0.0
      %1449 = vmatpush1.msra.mxu0 %v1422
      %1450 = vmatprep.subr.mxu0 0.0
      %1451 = vmatpush1.msra.mxu0 0.0
      %1452 = vmatprep.subr.mxu0 0.0
      %1453 = vmatpush1.msra.mxu0 0.0
      %1454 = vmatprep.subr.mxu0 0.0
      %1455 = vmatpush1.msra.mxu0 0.0
      %1456 = vmatprep.subr.mxu0 0.0
      %1457 = vmatpush1.msra.mxu0 0.0
      %1458 = vmatprep.subr.mxu0 0.0
      %1459 = vmatpush1.msra.mxu0 0.0
      %1460 = vmatprep.subr.mxu0 0.0
      %1461 = vmatpush1.msra.mxu0 0.0
      %1462 = vmatprep.subr.mxu0 0.0
      %1463 = vmatpush1.msra.mxu0 0.0
      %1464 = vmatprep.subr.mxu0 0.0
      %1465 = vmatpush1.msra.mxu0 0.0
      %1466 = vmatprep.subr.mxu0 0.0
      %1467 = vmatpush1.msra.mxu0 0.0
      %1468 = vmatprep.subr.mxu0 0.0
      %1469 = vmatpush1.msra.mxu0 0.0
      %1470 = vmatprep.subr.mxu0 0.0
      %1471 = vmatpush1.msra.mxu0 0.0
      %1472 = vmatprep.subr.mxu0 0.0
      %1473 = vmatpush1.msra.mxu0 0.0
      %1474 = vmatprep.subr.mxu0 0.0
      %1475 = vmatpush1.msra.mxu0 0.0
      %1476 = vmatprep.subr.mxu0 0.0
      %1477 = vmatpush1.msra.mxu0 0.0
      %1478 = vmatprep.subr.mxu0 0.0
      %1479 = vmatpush1.msra.mxu0 0.0
      %1480 = vmatprep.subr.mxu0 0.0
      %1481 = vmatpush1.msra.mxu0 0.0
      %1482 = vmatprep.subr.mxu0 0.0
      %1483 = vmatpush1.msra.mxu0 0.0
      %1484 = vmatprep.subr.mxu0 0.0
      %1485 = vmatpush1.msra.mxu0 0.0
      %1486 = vmatprep.subr.mxu0 0.0
      %1487 = vmatpush1.msra.mxu0 0.0
      %1488 = vmatprep.mubr.f32.mxu0 0.0
      %1489 = vmatmul.mubr.f32.gmra.mrb[0].mxu0 %v1229
      %v1490 = vpop.f32.mrb[0].mxu0
      %v1491 = vadd.f32 %v1225, %v1490
      %v1492 = vpop.f32.mrb[0].mxu0
      %1493 = vmatprep.mubr.f32.mxu0 0.0
      %1494 = vmatmul.mubr.f32.gmra.mrb[0].mxu0 %v1232
      %v1495 = vpop.f32.mrb[0].mxu0
      %v1496 = vadd.f32 %v1225, %v1495
      %v1497 = vpop.f32.mrb[0].mxu0
      %1498 = vmatprep.mubr.f32.mxu0 0.0
      %1499 = vmatmul.mubr.f32.gmra.mrb[0].mxu0 %v1235
      %v1500 = vpop.f32.mrb[0].mxu0
      %v1501 = vadd.f32 %v1225, %v1500
      %v1502 = vpop.f32.mrb[0].mxu0
      %1503 = vmatprep.mubr.f32.mxu0 0.0
      %1504 = vmatmul.mubr.f32.gmra.mrb[0].mxu0 %v1238
      %v1505 = vpop.f32.mrb[0].mxu0
      %v1506 = vadd.f32 %v1225, %v1505
      %v1507 = vpop.f32.mrb[0].mxu0
      %1508 = vmatprep.mubr.f32.mxu0 0.0
      %1509 = vmatmul.mubr.f32.gmra.mrb[0].mxu0 %v1241
      %v1510 = vpop.f32.mrb[0].mxu0
      %v1511 = vadd.f32 %v1225, %v1510
      %v1512 = vpop.f32.mrb[0].mxu0
      %1513 = vmatprep.mubr.f32.mxu0 0.0
      %1514 = vmatmul.mubr.f32.gmra.mrb[0].mxu0 %v1244
      %v1515 = vpop.f32.mrb[0].mxu0
      %v1516 = vadd.f32 %v1225, %v1515
      %v1517 = vpop.f32.mrb[0].mxu0
      %1518 = vmatprep.mubr.f32.mxu0 0.0
      %1519 = vmatmul.mubr.f32.gmra.mrb[0].mxu0 %v1247
      %v1520 = vpop.f32.mrb[0].mxu0
      %v1521 = vadd.f32 %v1225, %v1520
      %v1522 = vpop.f32.mrb[0].mxu0
      %1523 = vmatprep.mubr.f32.mxu0 0.0
      %1524 = vmatmul.mubr.f32.gmra.mrb[0].mxu0 %v1250
      %v1525 = vpop.f32.mrb[0].mxu0
      %v1526 = vadd.f32 %v1225, %v1525
      %v1527 = vpop.f32.mrb[0].mxu0
      %1528 = vmatprep.mubr.f32.mxu0 0.0
      %1529 = vmatmul.mubr.f32.gmra.mrb[0].mxu0 %v1253
      %v1530 = vpop.f32.mrb[0].mxu0
      %v1531 = vadd.f32 %v1225, %v1530
      %v1532 = vpop.f32.mrb[0].mxu0
      %1533 = vmatprep.mubr.f32.mxu0 0.0
      %1534 = vmatmul.mubr.f32.gmra.mrb[0].mxu0 %v1256
      %v1535 = vpop.f32.mrb[0].mxu0
      %v1536 = vadd.f32 %v1225, %v1535
      %v1537 = vpop.f32.mrb[0].mxu0
      %1538 = vmatprep.mubr.f32.mxu0 0.0
      %1539 = vmatmul.mubr.f32.gmra.mrb[0].mxu0 %v1259
      %v1540 = vpop.f32.mrb[0].mxu0
      %v1541 = vadd.f32 %v1225, %v1540
      %v1542 = vpop.f32.mrb[0].mxu0
      %1543 = vmatprep.mubr.f32.mxu0 0.0
      %1544 = vmatmul.mubr.f32.gmra.mrb[0].mxu0 %v1262
      %v1545 = vpop.f32.mrb[0].mxu0
      %v1546 = vadd.f32 %v1225, %v1545
      %v1547 = vpop.f32.mrb[0].mxu0
      %1548 = vmatprep.mubr.f32.mxu0 0.0
      %1549 = vmatmul.mubr.f32.gmra.mrb[0].mxu0 %v1265
      %v1550 = vpop.f32.mrb[0].mxu0
      %v1551 = vadd.f32 %v1225, %v1550
      %v1552 = vpop.f32.mrb[0].mxu0
      %1553 = vmatprep.mubr.f32.mxu0 0.0
      %1554 = vmatmul.mubr.f32.gmra.mrb[0].mxu0 %v1268
      %v1555 = vpop.f32.mrb[0].mxu0
      %v1556 = vadd.f32 %v1225, %v1555
      %v1557 = vpop.f32.mrb[0].mxu0
      %1558 = vmatprep.mubr.f32.mxu0 0.0
      %1559 = vmatmul.mubr.f32.gmra.mrb[0].mxu0 %v1271
      %v1560 = vpop.f32.mrb[0].mxu0
      %v1561 = vadd.f32 %v1225, %v1560
      %v1562 = vpop.f32.mrb[0].mxu0
      %1563 = vmatprep.mubr.f32.mxu0 0.0
      %1564 = vmatmul.mubr.f32.gmra.mrb[0].mxu0 %v1274
      %v1565 = vpop.f32.mrb[0].mxu0
      %v1566 = vadd.f32 %v1225, %v1565
      %v1567 = vpop.f32.mrb[0].mxu0
      %1568 = vmatprep.mubr.f32.mxu0 0.0
      %1569 = vmatmul.mubr.f32.gmra.mrb[0].mxu0 %v1277
      %v1570 = vpop.f32.mrb[0].mxu0
      %v1571 = vadd.f32 %v1225, %v1570
      %v1572 = vpop.f32.mrb[0].mxu0
      %1573 = vmatprep.mubr.f32.mxu0 0.0
      %1574 = vmatmul.mubr.f32.gmra.mrb[0].mxu0 %v1280
      %v1575 = vpop.f32.mrb[0].mxu0
      %v1576 = vadd.f32 %v1225, %v1575
      %v1577 = vpop.f32.mrb[0].mxu0
      %1578 = vmatprep.mubr.f32.mxu0 0.0
      %1579 = vmatmul.mubr.f32.gmra.mrb[0].mxu0 %v1283
      %v1580 = vpop.f32.mrb[0].mxu0
      %v1581 = vadd.f32 %v1225, %v1580
      %v1582 = vpop.f32.mrb[0].mxu0
      %1583 = vmatprep.mubr.f32.mxu0 0.0
      %1584 = vmatmul.mubr.f32.gmra.mrb[0].mxu0 %v1286
      %v1585 = vpop.f32.mrb[0].mxu0
      %v1586 = vadd.f32 %v1225, %v1585
      %v1587 = vpop.f32.mrb[0].mxu0
      %1588 = vmatprep.mubr.f32.mxu0 0.0
      %1589 = vmatmul.mubr.f32.gmra.mrb[0].mxu0 %v1289
      %v1590 = vpop.f32.mrb[0].mxu0
      %v1591 = vadd.f32 %v1225, %v1590
      %v1592 = vpop.f32.mrb[0].mxu0
      %1593 = vmatprep.mubr.f32.mxu0 0.0
      %1594 = vmatmul.mubr.f32.gmra.mrb[0].mxu0 %v1292
      %v1595 = vpop.f32.mrb[0].mxu0
      %v1596 = vadd.f32 %v1225, %v1595
      %v1597 = vpop.f32.mrb[0].mxu0
      %1598 = vmatprep.mubr.f32.mxu0 0.0
      %1599 = vmatmul.mubr.f32.gmra.mrb[0].mxu0 %v1295
      %v1600 = vpop.f32.mrb[0].mxu0
      %v1601 = vadd.f32 %v1225, %v1600
      %v1602 = vpop.f32.mrb[0].mxu0
      %1603 = vmatprep.mubr.f32.mxu0 0.0
      %1604 = vmatmul.mubr.f32.gmra.mrb[0].mxu0 %v1298
      %v1605 = vpop.f32.mrb[0].mxu0
      %v1606 = vadd.f32 %v1225, %v1605
      %v1607 = vpop.f32.mrb[0].mxu0
      %1608 = vmatprep.mubr.f32.mxu0 0.0
      %1609 = vmatmul.mubr.f32.gmra.mrb[0].mxu0 %v1301
      %v1610 = vpop.f32.mrb[0].mxu0
      %v1611 = vadd.f32 %v1225, %v1610
      %v1612 = vpop.f32.mrb[0].mxu0
      %1613 = vmatprep.mubr.f32.mxu0 0.0
      %1614 = vmatmul.mubr.f32.gmra.mrb[0].mxu0 %v1304
      %v1615 = vpop.f32.mrb[0].mxu0
      %v1616 = vadd.f32 %v1225, %v1615
      %v1617 = vpop.f32.mrb[0].mxu0
      %1618 = vmatprep.mubr.f32.mxu0 0.0
      %1619 = vmatmul.mubr.f32.gmra.mrb[0].mxu0 %v1307
      %v1620 = vpop.f32.mrb[0].mxu0
      %v1621 = vadd.f32 %v1225, %v1620
      %v1622 = vpop.f32.mrb[0].mxu0
      %1623 = vmatprep.mubr.f32.mxu0 0.0
      %1624 = vmatmul.mubr.f32.gmra.mrb[0].mxu0 %v1310
      %v1625 = vpop.f32.mrb[0].mxu0
      %v1626 = vadd.f32 %v1225, %v1625
      %v1627 = vpop.f32.mrb[0].mxu0
      %1628 = vmatprep.mubr.f32.mxu0 0.0
      %1629 = vmatmul.mubr.f32.gmra.mrb[0].mxu0 %v1313
      %v1630 = vpop.f32.mrb[0].mxu0
      %v1631 = vadd.f32 %v1225, %v1630
      %v1632 = vpop.f32.mrb[0].mxu0
      %1633 = vmatprep.mubr.f32.mxu0 0.0
      %1634 = vmatmul.mubr.f32.gmra.mrb[0].mxu0 %v1316
      %v1635 = vpop.f32.mrb[0].mxu0
      %v1636 = vadd.f32 %v1225, %v1635
      %v1637 = vpop.f32.mrb[0].mxu0
      %1638 = vmatprep.mubr.f32.mxu0 0.0
      %1639 = vmatmul.mubr.f32.gmra.mrb[0].mxu0 %v1319
      %v1640 = vpop.f32.mrb[0].mxu0
      %v1641 = vadd.f32 %v1225, %v1640
      %v1642 = vpop.f32.mrb[0].mxu0
      %1643 = vmatprep.mubr.f32.mxu0 0.0
      %1644 = vmatmul.mubr.f32.gmra.mrb[0].mxu0 %v1322
      %v1645 = vpop.f32.mrb[0].mxu0
      %v1646 = vadd.f32 %v1225, %v1645
      %v1647 = vpop.f32.mrb[0].mxu0
      %1648 = vmatprep.mubr.f32.mxu0 0.0
      %1649 = vmatmul.mubr.f32.gmra.mrb[0].mxu0 %v1325
      %v1650 = vpop.f32.mrb[0].mxu0
      %v1651 = vadd.f32 %v1225, %v1650
      %v1652 = vpop.f32.mrb[0].mxu0
      %1653 = vmatprep.mubr.f32.mxu0 0.0
      %1654 = vmatmul.mubr.f32.gmra.mrb[0].mxu0 %v1328
      %v1655 = vpop.f32.mrb[0].mxu0
      %v1656 = vadd.f32 %v1225, %v1655
      %v1657 = vpop.f32.mrb[0].mxu0
      %1658 = vmatprep.mubr.f32.mxu0 0.0
      %1659 = vmatmul.mubr.f32.gmra.mrb[0].mxu0 %v1331
      %v1660 = vpop.f32.mrb[0].mxu0
      %v1661 = vadd.f32 %v1225, %v1660
      %v1662 = vpop.f32.mrb[0].mxu0
      %1663 = vmatprep.mubr.f32.mxu0 0.0
      %1664 = vmatmul.mubr.f32.gmra.mrb[0].mxu0 %v1334
      %v1665 = vpop.f32.mrb[0].mxu0
      %v1666 = vadd.f32 %v1225, %v1665
      %v1667 = vpop.f32.mrb[0].mxu0
      %1668 = vmatprep.mubr.f32.mxu0 0.0
      %1669 = vmatmul.mubr.f32.gmra.mrb[0].mxu0 %v1337
      %v1670 = vpop.f32.mrb[0].mxu0
      %v1671 = vadd.f32 %v1225, %v1670
      %v1672 = vpop.f32.mrb[0].mxu0
      %1673 = vmatprep.mubr.f32.mxu0 0.0
      %1674 = vmatmul.mubr.f32.gmra.mrb[0].mxu0 %v1340
      %v1675 = vpop.f32.mrb[0].mxu0
      %v1676 = vadd.f32 %v1225, %v1675
      %v1677 = vpop.f32.mrb[0].mxu0
      %1678 = vmatprep.mubr.f32.mxu0 0.0
      %1679 = vmatmul.mubr.f32.gmra.mrb[0].mxu0 %v1343
      %v1680 = vpop.f32.mrb[0].mxu0
      %v1681 = vadd.f32 %v1225, %v1680
      %v1682 = vpop.f32.mrb[0].mxu0
      %1683 = vmatprep.mubr.f32.mxu0 0.0
      %1684 = vmatmul.mubr.f32.gmra.mrb[0].mxu0 %v1346
      %v1685 = vpop.f32.mrb[0].mxu0
      %v1686 = vadd.f32 %v1225, %v1685
      %v1687 = vpop.f32.mrb[0].mxu0
      %1688 = vmatprep.mubr.f32.mxu0 0.0
      %1689 = vmatmul.mubr.f32.gmra.mrb[0].mxu0 %v1349
      %v1690 = vpop.f32.mrb[0].mxu0
      %v1691 = vadd.f32 %v1225, %v1690
      %v1692 = vpop.f32.mrb[0].mxu0
      %1693 = vmatprep.mubr.f32.mxu0 0.0
      %1694 = vmatmul.mubr.f32.gmra.mrb[0].mxu0 %v1352
      %v1695 = vpop.f32.mrb[0].mxu0
      %v1696 = vadd.f32 %v1225, %v1695
      %v1697 = vpop.f32.mrb[0].mxu0
      %1698 = vmatprep.mubr.f32.mxu0 0.0
      %1699 = vmatmul.mubr.f32.gmra.mrb[0].mxu0 %v1355
      %v1700 = vpop.f32.mrb[0].mxu0
      %v1701 = vadd.f32 %v1225, %v1700
      %v1702 = vpop.f32.mrb[0].mxu0
      %1703 = vmatprep.mubr.f32.mxu0 0.0
      %1704 = vmatmul.mubr.f32.gmra.mrb[0].mxu0 %v1358
      %v1705 = vpop.f32.mrb[0].mxu0
      %v1706 = vadd.f32 %v1225, %v1705
      %v1707 = vpop.f32.mrb[0].mxu0
      %1708 = vmatprep.mubr.f32.mxu0 0.0
      %1709 = vmatmul.mubr.f32.gmra.mrb[0].mxu0 %v1361
      %v1710 = vpop.f32.mrb[0].mxu0
      %v1711 = vadd.f32 %v1225, %v1710
      %v1712 = vpop.f32.mrb[0].mxu0
      %1713 = vmatprep.mubr.f32.mxu0 0.0
      %1714 = vmatmul.mubr.f32.gmra.mrb[0].mxu0 %v1364
      %v1715 = vpop.f32.mrb[0].mxu0
      %v1716 = vadd.f32 %v1225, %v1715
      %v1717 = vpop.f32.mrb[0].mxu0
      %1718 = vmatprep.mubr.f32.mxu0 0.0
      %1719 = vmatmul.mubr.f32.gmra.mrb[0].mxu0 %v1367
      %v1720 = vpop.f32.mrb[0].mxu0
      %v1721 = vadd.f32 %v1225, %v1720
      %v1722 = vpop.f32.mrb[0].mxu0
      %1723 = vmatprep.mubr.f32.mxu0 0.0
      %1724 = vmatmul.mubr.f32.gmra.mrb[0].mxu0 %v1370
      %v1725 = vpop.f32.mrb[0].mxu0
      %v1726 = vadd.f32 %v1225, %v1725
      %v1727 = vpop.f32.mrb[0].mxu0
      %1728 = vmatprep.mubr.f32.mxu0 0.0
      %1729 = vmatmul.mubr.f32.gmra.mrb[0].mxu0 %v1373
      %v1730 = vpop.f32.mrb[0].mxu0
      %v1731 = vadd.f32 %v1225, %v1730
      %v1732 = vpop.f32.mrb[0].mxu0
      %1733 = vmatprep.mubr.f32.mxu0 0.0
      %1734 = vmatmul.mubr.f32.gmra.mrb[0].mxu0 %v1376
      %v1735 = vpop.f32.mrb[0].mxu0
      %v1736 = vadd.f32 %v1225, %v1735
      %v1737 = vpop.f32.mrb[0].mxu0
      %1738 = vmatprep.mubr.f32.mxu0 0.0
      %1739 = vmatmul.mubr.f32.gmra.mrb[0].mxu0 %v1379
      %v1740 = vpop.f32.mrb[0].mxu0
      %v1741 = vadd.f32 %v1225, %v1740
      %v1742 = vpop.f32.mrb[0].mxu0
      %1743 = vmatprep.mubr.f32.mxu0 0.0
      %1744 = vmatmul.mubr.f32.gmra.mrb[0].mxu0 %v1382
      %v1745 = vpop.f32.mrb[0].mxu0
      %v1746 = vadd.f32 %v1225, %v1745
      %v1747 = vpop.f32.mrb[0].mxu0
      %1748 = vmatprep.mubr.f32.mxu0 0.0
      %1749 = vmatmul.mubr.f32.gmra.mrb[0].mxu0 %v1385
      %v1750 = vpop.f32.mrb[0].mxu0
      %v1751 = vadd.f32 %v1225, %v1750
      %v1752 = vpop.f32.mrb[0].mxu0
      %1753 = vmatprep.mubr.f32.mxu0 0.0
      %1754 = vmatmul.mubr.f32.gmra.mrb[0].mxu0 %v1388
      %v1755 = vpop.f32.mrb[0].mxu0
      %v1756 = vadd.f32 %v1225, %v1755
      %v1757 = vpop.f32.mrb[0].mxu0
      %1758 = vmatprep.mubr.f32.mxu0 0.0
      %1759 = vmatmul.mubr.f32.gmra.mrb[0].mxu0 %v1391
      %v1760 = vpop.f32.mrb[0].mxu0
      %v1761 = vadd.f32 %v1225, %v1760
      %v1762 = vpop.f32.mrb[0].mxu0
      %1763 = vmatprep.mubr.f32.mxu0 0.0
      %1764 = vmatmul.mubr.f32.gmra.mrb[0].mxu0 %v1394
      %v1765 = vpop.f32.mrb[0].mxu0
      %v1766 = vadd.f32 %v1225, %v1765
      %v1767 = vpop.f32.mrb[0].mxu0
      %1768 = vmatprep.mubr.f32.mxu0 0.0
      %1769 = vmatmul.mubr.f32.gmra.mrb[0].mxu0 %v1397
      %v1770 = vpop.f32.mrb[0].mxu0
      %v1771 = vadd.f32 %v1225, %v1770
      %v1772 = vpop.f32.mrb[0].mxu0
      %1773 = vmatprep.mubr.f32.mxu0 0.0
      %1774 = vmatmul.mubr.f32.gmra.mrb[0].mxu0 %v1400
      %v1775 = vpop.f32.mrb[0].mxu0
      %v1776 = vadd.f32 %v1225, %v1775
      %v1777 = vpop.f32.mrb[0].mxu0
      %1778 = vmatprep.mubr.f32.mxu0 0.0
      %1779 = vmatmul.mubr.f32.gmra.mrb[0].mxu0 %v1403
      %v1780 = vpop.f32.mrb[0].mxu0
      %v1781 = vadd.f32 %v1225, %v1780
      %v1782 = vpop.f32.mrb[0].mxu0
      %1783 = vmatprep.mubr.f32.mxu0 0.0
      %1784 = vmatmul.mubr.f32.gmra.mrb[0].mxu0 %v1406
      %v1785 = vpop.f32.mrb[0].mxu0
      %v1786 = vadd.f32 %v1225, %v1785
      %v1787 = vpop.f32.mrb[0].mxu0
      %1788 = vmatprep.mubr.f32.mxu0 0.0
      %1789 = vmatmul.mubr.f32.gmra.mrb[0].mxu0 %v1409
      %v1790 = vpop.f32.mrb[0].mxu0
      %v1791 = vadd.f32 %v1225, %v1790
      %v1792 = vpop.f32.mrb[0].mxu0
      %1793 = vmatprep.mubr.f32.mxu0 0.0
      %1794 = vmatmul.mubr.f32.gmra.mrb[0].mxu0 %v1412
      %v1795 = vpop.f32.mrb[0].mxu0
      %v1796 = vadd.f32 %v1225, %v1795
      %v1797 = vpop.f32.mrb[0].mxu0
      %1798 = vmatprep.mubr.f32.mxu0 0.0
      %1799 = vmatmul.mubr.f32.gmra.mrb[0].mxu0 %v1415
      %v1800 = vpop.f32.mrb[0].mxu0
      %v1801 = vadd.f32 %v1225, %v1800
      %v1802 = vpop.f32.mrb[0].mxu0
      %1803 = vmatprep.mubr.f32.mxu0 0.0
      %1804 = vmatmul.mubr.f32.gmra.mrb[0].mxu0 %v1418
      %v1805 = vpop.f32.mrb[0].mxu0
      %v1806 = vadd.f32 %v1225, %v1805
      %v1807 = vpop.f32.mrb[0].mxu0
      %1808 = vdwg.mxu0
      %v1809 = vand.u32 2147483647, %v1491
      %v1810 = vand.u32 2147483647, %v1496
      %v1811 = vand.u32 2147483647, %v1501
      %v1812 = vand.u32 2147483647, %v1506
      %v1813 = vand.u32 2147483647, %v1511
      %v1814 = vand.u32 2147483647, %v1516
      %v1815 = vand.u32 2147483647, %v1521
      %v1816 = vand.u32 2147483647, %v1526
      %v1817 = vand.u32 2147483647, %v1531
      %v1818 = vand.u32 2147483647, %v1536
      %v1819 = vand.u32 2147483647, %v1541
      %v1820 = vand.u32 2147483647, %v1546
      %v1821 = vand.u32 2147483647, %v1551
      %v1822 = vand.u32 2147483647, %v1556
      %v1823 = vand.u32 2147483647, %v1561
      %v1824 = vand.u32 2147483647, %v1566
      %v1825 = vand.u32 2147483647, %v1571
      %v1826 = vand.u32 2147483647, %v1576
      %v1827 = vand.u32 2147483647, %v1581
      %v1828 = vand.u32 2147483647, %v1586
      %v1829 = vand.u32 2147483647, %v1591
      %v1830 = vand.u32 2147483647, %v1596
      %v1831 = vand.u32 2147483647, %v1601
      %v1832 = vand.u32 2147483647, %v1606
      %v1833 = vand.u32 2147483647, %v1611
      %v1834 = vand.u32 2147483647, %v1616
      %v1835 = vand.u32 2147483647, %v1621
      %v1836 = vand.u32 2147483647, %v1626
      %v1837 = vand.u32 2147483647, %v1631
      %v1838 = vand.u32 2147483647, %v1636
      %v1839 = vand.u32 2147483647, %v1641
      %v1840 = vand.u32 2147483647, %v1646
      %v1841 = vand.u32 2147483647, %v1651
      %v1842 = vand.u32 2147483647, %v1656
      %v1843 = vand.u32 2147483647, %v1661
      %v1844 = vand.u32 2147483647, %v1666
      %v1845 = vand.u32 2147483647, %v1671
      %v1846 = vand.u32 2147483647, %v1676
      %v1847 = vand.u32 2147483647, %v1681
      %v1848 = vand.u32 2147483647, %v1686
      %v1849 = vand.u32 2147483647, %v1691
      %v1850 = vand.u32 2147483647, %v1696
      %v1851 = vand.u32 2147483647, %v1701
      %v1852 = vand.u32 2147483647, %v1706
      %v1853 = vand.u32 2147483647, %v1711
      %v1854 = vand.u32 2147483647, %v1716
      %v1855 = vand.u32 2147483647, %v1721
      %v1856 = vand.u32 2147483647, %v1726
      %v1857 = vand.u32 2147483647, %v1731
      %v1858 = vand.u32 2147483647, %v1736
      %v1859 = vand.u32 2147483647, %v1741
      %v1860 = vand.u32 2147483647, %v1746
      %v1861 = vand.u32 2147483647, %v1751
      %v1862 = vand.u32 2147483647, %v1756
      %v1863 = vand.u32 2147483647, %v1761
      %v1864 = vand.u32 2147483647, %v1766
      %v1865 = vand.u32 2147483647, %v1771
      %v1866 = vand.u32 2147483647, %v1776
      %v1867 = vand.u32 2147483647, %v1781
      %v1868 = vand.u32 2147483647, %v1786
      %v1869 = vand.u32 2147483647, %v1791
      %v1870 = vand.u32 2147483647, %v1796
      %v1871 = vand.u32 2147483647, %v1801
      %v1872 = vand.u32 2147483647, %v1806
      %v1873 = vsub.f32 0.0, %v1809
      %v1874 = vsub.f32 0.0, %v1810
      %v1875 = vsub.f32 0.0, %v1811
      %v1876 = vsub.f32 0.0, %v1812
      %v1877 = vsub.f32 0.0, %v1813
      %v1878 = vsub.f32 0.0, %v1814
      %v1879 = vsub.f32 0.0, %v1815
      %v1880 = vsub.f32 0.0, %v1816
      %v1881 = vsub.f32 0.0, %v1817
      %v1882 = vsub.f32 0.0, %v1818
      %v1883 = vsub.f32 0.0, %v1819
      %v1884 = vsub.f32 0.0, %v1820
      %v1885 = vsub.f32 0.0, %v1821
      %v1886 = vsub.f32 0.0, %v1822
      %v1887 = vsub.f32 0.0, %v1823
      %v1888 = vsub.f32 0.0, %v1824
      %v1889 = vsub.f32 0.0, %v1825
      %v1890 = vsub.f32 0.0, %v1826
      %v1891 = vsub.f32 0.0, %v1827
      %v1892 = vsub.f32 0.0, %v1828
      %v1893 = vsub.f32 0.0, %v1829
      %v1894 = vsub.f32 0.0, %v1830
      %v1895 = vsub.f32 0.0, %v1831
      %v1896 = vsub.f32 0.0, %v1832
      %v1897 = vsub.f32 0.0, %v1833
      %v1898 = vsub.f32 0.0, %v1834
      %v1899 = vsub.f32 0.0, %v1835
      %v1900 = vsub.f32 0.0, %v1836
      %v1901 = vsub.f32 0.0, %v1837
      %v1902 = vsub.f32 0.0, %v1838
      %v1903 = vsub.f32 0.0, %v1839
      %v1904 = vsub.f32 0.0, %v1840
      %v1905 = vsub.f32 0.0, %v1841
      %v1906 = vsub.f32 0.0, %v1842
      %v1907 = vsub.f32 0.0, %v1843
      %v1908 = vsub.f32 0.0, %v1844
      %v1909 = vsub.f32 0.0, %v1845
      %v1910 = vsub.f32 0.0, %v1846
      %v1911 = vsub.f32 0.0, %v1847
      %v1912 = vsub.f32 0.0, %v1848
      %v1913 = vsub.f32 0.0, %v1849
      %v1914 = vsub.f32 0.0, %v1850
      %v1915 = vsub.f32 0.0, %v1851
      %v1916 = vsub.f32 0.0, %v1852
      %v1917 = vsub.f32 0.0, %v1853
      %v1918 = vsub.f32 0.0, %v1854
      %v1919 = vsub.f32 0.0, %v1855
      %v1920 = vsub.f32 0.0, %v1856
      %v1921 = vsub.f32 0.0, %v1857
      %v1922 = vsub.f32 0.0, %v1858
      %v1923 = vsub.f32 0.0, %v1859
      %v1924 = vsub.f32 0.0, %v1860
      %v1925 = vsub.f32 0.0, %v1861
      %v1926 = vsub.f32 0.0, %v1862
      %v1927 = vsub.f32 0.0, %v1863
      %v1928 = vsub.f32 0.0, %v1864
      %v1929 = vsub.f32 0.0, %v1865
      %v1930 = vsub.f32 0.0, %v1866
      %v1931 = vsub.f32 0.0, %v1867
      %v1932 = vsub.f32 0.0, %v1868
      %v1933 = vsub.f32 0.0, %v1869
      %v1934 = vsub.f32 0.0, %v1870
      %v1935 = vsub.f32 0.0, %v1871
      %v1936 = vsub.f32 0.0, %v1872
      %v1937 = vmul.f32 %v1873, 1.442695
      %v1938 = vpow.pop %v1937
      %v1939 = vmul.f32 %v1874, 1.442695
      %v1940 = vpow.pop %v1939
      %v1941 = vmul.f32 %v1875, 1.442695
      %v1942 = vpow.pop %v1941
      %v1943 = vmul.f32 %v1876, 1.442695
      %v1944 = vpow.pop %v1943
      %v1945 = vmul.f32 %v1877, 1.442695
      %v1946 = vpow.pop %v1945
      %v1947 = vmul.f32 %v1878, 1.442695
      %v1948 = vpow.pop %v1947
      %v1949 = vmul.f32 %v1879, 1.442695
      %v1950 = vpow.pop %v1949
      %v1951 = vmul.f32 %v1880, 1.442695
      %v1952 = vpow.pop %v1951
      %v1953 = vmul.f32 %v1881, 1.442695
      %v1954 = vpow.pop %v1953
      %v1955 = vmul.f32 %v1882, 1.442695
      %v1956 = vpow.pop %v1955
      %v1957 = vmul.f32 %v1883, 1.442695
      %v1958 = vpow.pop %v1957
      %v1959 = vmul.f32 %v1884, 1.442695
      %v1960 = vpow.pop %v1959
      %v1961 = vmul.f32 %v1885, 1.442695
      %v1962 = vpow.pop %v1961
      %v1963 = vmul.f32 %v1886, 1.442695
      %v1964 = vpow.pop %v1963
      %v1965 = vmul.f32 %v1887, 1.442695
      %v1966 = vpow.pop %v1965
      %v1967 = vmul.f32 %v1888, 1.442695
      %v1968 = vpow.pop %v1967
      %v1969 = vmul.f32 %v1889, 1.442695
      %v1970 = vpow.pop %v1969
      %v1971 = vmul.f32 %v1890, 1.442695
      %v1972 = vpow.pop %v1971
      %v1973 = vmul.f32 %v1891, 1.442695
      %v1974 = vpow.pop %v1973
      %v1975 = vmul.f32 %v1892, 1.442695
      %v1976 = vpow.pop %v1975
      %v1977 = vmul.f32 %v1893, 1.442695
      %v1978 = vpow.pop %v1977
      %v1979 = vmul.f32 %v1894, 1.442695
      %v1980 = vpow.pop %v1979
      %v1981 = vmul.f32 %v1895, 1.442695
      %v1982 = vpow.pop %v1981
      %v1983 = vmul.f32 %v1896, 1.442695
      %v1984 = vpow.pop %v1983
      %v1985 = vmul.f32 %v1897, 1.442695
      %v1986 = vpow.pop %v1985
      %v1987 = vmul.f32 %v1898, 1.442695
      %v1988 = vpow.pop %v1987
      %v1989 = vmul.f32 %v1899, 1.442695
      %v1990 = vpow.pop %v1989
      %v1991 = vmul.f32 %v1900, 1.442695
      %v1992 = vpow.pop %v1991
      %v1993 = vmul.f32 %v1901, 1.442695
      %v1994 = vpow.pop %v1993
      %v1995 = vmul.f32 %v1902, 1.442695
      %v1996 = vpow.pop %v1995
      %v1997 = vmul.f32 %v1903, 1.442695
      %v1998 = vpow.pop %v1997
      %v1999 = vmul.f32 %v1904, 1.442695
      %v2000 = vpow.pop %v1999
      %v2001 = vmul.f32 %v1905, 1.442695
      %v2002 = vpow.pop %v2001
      %v2003 = vmul.f32 %v1906, 1.442695
      %v2004 = vpow.pop %v2003
      %v2005 = vmul.f32 %v1907, 1.442695
      %v2006 = vpow.pop %v2005
      %v2007 = vmul.f32 %v1908, 1.442695
      %v2008 = vpow.pop %v2007
      %v2009 = vmul.f32 %v1909, 1.442695
      %v2010 = vpow.pop %v2009
      %v2011 = vmul.f32 %v1910, 1.442695
      %v2012 = vpow.pop %v2011
      %v2013 = vmul.f32 %v1911, 1.442695
      %v2014 = vpow.pop %v2013
      %v2015 = vmul.f32 %v1912, 1.442695
      %v2016 = vpow.pop %v2015
      %v2017 = vmul.f32 %v1913, 1.442695
      %v2018 = vpow.pop %v2017
      %v2019 = vmul.f32 %v1914, 1.442695
      %v2020 = vpow.pop %v2019
      %v2021 = vmul.f32 %v1915, 1.442695
      %v2022 = vpow.pop %v2021
      %v2023 = vmul.f32 %v1916, 1.442695
      %v2024 = vpow.pop %v2023
      %v2025 = vmul.f32 %v1917, 1.442695
      %v2026 = vpow.pop %v2025
      %v2027 = vmul.f32 %v1918, 1.442695
      %v2028 = vpow.pop %v2027
      %v2029 = vmul.f32 %v1919, 1.442695
      %v2030 = vpow.pop %v2029
      %v2031 = vmul.f32 %v1920, 1.442695
      %v2032 = vpow.pop %v2031
      %v2033 = vmul.f32 %v1921, 1.442695
      %v2034 = vpow.pop %v2033
      %v2035 = vmul.f32 %v1922, 1.442695
      %v2036 = vpow.pop %v2035
      %v2037 = vmul.f32 %v1923, 1.442695
      %v2038 = vpow.pop %v2037
      %v2039 = vmul.f32 %v1924, 1.442695
      %v2040 = vpow.pop %v2039
      %v2041 = vmul.f32 %v1925, 1.442695
      %v2042 = vpow.pop %v2041
      %v2043 = vmul.f32 %v1926, 1.442695
      %v2044 = vpow.pop %v2043
      %v2045 = vmul.f32 %v1927, 1.442695
      %v2046 = vpow.pop %v2045
      %v2047 = vmul.f32 %v1928, 1.442695
      %v2048 = vpow.pop %v2047
      %v2049 = vmul.f32 %v1929, 1.442695
      %v2050 = vpow.pop %v2049
      %v2051 = vmul.f32 %v1930, 1.442695
      %v2052 = vpow.pop %v2051
      %v2053 = vmul.f32 %v1931, 1.442695
      %v2054 = vpow.pop %v2053
      %v2055 = vmul.f32 %v1932, 1.442695
      %v2056 = vpow.pop %v2055
      %v2057 = vmul.f32 %v1933, 1.442695
      %v2058 = vpow.pop %v2057
      %v2059 = vmul.f32 %v1934, 1.442695
      %v2060 = vpow.pop %v2059
      %v2061 = vmul.f32 %v1935, 1.442695
      %v2062 = vpow.pop %v2061
      %v2063 = vmul.f32 %v1936, 1.442695
      %v2064 = vpow.pop %v2063
      %v2065 = vadd.f32 %v1938, 1.0
      %v2066 = vadd.f32 %v1940, 1.0
      %v2067 = vadd.f32 %v1942, 1.0
      %v2068 = vadd.f32 %v1944, 1.0
      %v2069 = vadd.f32 %v1946, 1.0
      %v2070 = vadd.f32 %v1948, 1.0
      %v2071 = vadd.f32 %v1950, 1.0
      %v2072 = vadd.f32 %v1952, 1.0
      %v2073 = vadd.f32 %v1954, 1.0
      %v2074 = vadd.f32 %v1956, 1.0
      %v2075 = vadd.f32 %v1958, 1.0
      %v2076 = vadd.f32 %v1960, 1.0
      %v2077 = vadd.f32 %v1962, 1.0
      %v2078 = vadd.f32 %v1964, 1.0
      %v2079 = vadd.f32 %v1966, 1.0
      %v2080 = vadd.f32 %v1968, 1.0
      %v2081 = vadd.f32 %v1970, 1.0
      %v2082 = vadd.f32 %v1972, 1.0
      %v2083 = vadd.f32 %v1974, 1.0
      %v2084 = vadd.f32 %v1976, 1.0
      %v2085 = vadd.f32 %v1978, 1.0
      %v2086 = vadd.f32 %v1980, 1.0
      %v2087 = vadd.f32 %v1982, 1.0
      %v2088 = vadd.f32 %v1984, 1.0
      %v2089 = vadd.f32 %v1986, 1.0
      %v2090 = vadd.f32 %v1988, 1.0
      %v2091 = vadd.f32 %v1990, 1.0
      %v2092 = vadd.f32 %v1992, 1.0
      %v2093 = vadd.f32 %v1994, 1.0
      %v2094 = vadd.f32 %v1996, 1.0
      %v2095 = vadd.f32 %v1998, 1.0
      %v2096 = vadd.f32 %v2000, 1.0
      %v2097 = vadd.f32 %v2002, 1.0
      %v2098 = vadd.f32 %v2004, 1.0
      %v2099 = vadd.f32 %v2006, 1.0
      %v2100 = vadd.f32 %v2008, 1.0
      %v2101 = vadd.f32 %v2010, 1.0
      %v2102 = vadd.f32 %v2012, 1.0
      %v2103 = vadd.f32 %v2014, 1.0
      %v2104 = vadd.f32 %v2016, 1.0
      %v2105 = vadd.f32 %v2018, 1.0
      %v2106 = vadd.f32 %v2020, 1.0
      %v2107 = vadd.f32 %v2022, 1.0
      %v2108 = vadd.f32 %v2024, 1.0
      %v2109 = vadd.f32 %v2026, 1.0
      %v2110 = vadd.f32 %v2028, 1.0
      %v2111 = vadd.f32 %v2030, 1.0
      %v2112 = vadd.f32 %v2032, 1.0
      %v2113 = vadd.f32 %v2034, 1.0
      %v2114 = vadd.f32 %v2036, 1.0
      %v2115 = vadd.f32 %v2038, 1.0
      %v2116 = vadd.f32 %v2040, 1.0
      %v2117 = vadd.f32 %v2042, 1.0
      %v2118 = vadd.f32 %v2044, 1.0
      %v2119 = vadd.f32 %v2046, 1.0
      %v2120 = vadd.f32 %v2048, 1.0
      %v2121 = vadd.f32 %v2050, 1.0
      %v2122 = vadd.f32 %v2052, 1.0
      %v2123 = vadd.f32 %v2054, 1.0
      %v2124 = vadd.f32 %v2056, 1.0
      %v2125 = vadd.f32 %v2058, 1.0
      %v2126 = vadd.f32 %v2060, 1.0
      %v2127 = vadd.f32 %v2062, 1.0
      %v2128 = vadd.f32 %v2064, 1.0
      %v2129 = vrcp.pop %v2065
      %v2130 = vmul.f32 1.0, %v2129
      %v2131 = vrcp.pop %v2066
      %v2132 = vmul.f32 1.0, %v2131
      %v2133 = vrcp.pop %v2067
      %v2134 = vmul.f32 1.0, %v2133
      %v2135 = vrcp.pop %v2068
      %v2136 = vmul.f32 1.0, %v2135
      %v2137 = vrcp.pop %v2069
      %v2138 = vmul.f32 1.0, %v2137
      %v2139 = vrcp.pop %v2070
      %v2140 = vmul.f32 1.0, %v2139
      %v2141 = vrcp.pop %v2071
      %v2142 = vmul.f32 1.0, %v2141
      %v2143 = vrcp.pop %v2072
      %v2144 = vmul.f32 1.0, %v2143
      %v2145 = vrcp.pop %v2073
      %v2146 = vmul.f32 1.0, %v2145
      %v2147 = vrcp.pop %v2074
      %v2148 = vmul.f32 1.0, %v2147
      %v2149 = vrcp.pop %v2075
      %v2150 = vmul.f32 1.0, %v2149
      %v2151 = vrcp.pop %v2076
      %v2152 = vmul.f32 1.0, %v2151
      %v2153 = vrcp.pop %v2077
      %v2154 = vmul.f32 1.0, %v2153
      %v2155 = vrcp.pop %v2078
      %v2156 = vmul.f32 1.0, %v2155
      %v2157 = vrcp.pop %v2079
      %v2158 = vmul.f32 1.0, %v2157
      %v2159 = vrcp.pop %v2080
      %v2160 = vmul.f32 1.0, %v2159
      %v2161 = vrcp.pop %v2081
      %v2162 = vmul.f32 1.0, %v2161
      %v2163 = vrcp.pop %v2082
      %v2164 = vmul.f32 1.0, %v2163
      %v2165 = vrcp.pop %v2083
      %v2166 = vmul.f32 1.0, %v2165
      %v2167 = vrcp.pop %v2084
      %v2168 = vmul.f32 1.0, %v2167
      %v2169 = vrcp.pop %v2085
      %v2170 = vmul.f32 1.0, %v2169
      %v2171 = vrcp.pop %v2086
      %v2172 = vmul.f32 1.0, %v2171
      %v2173 = vrcp.pop %v2087
      %v2174 = vmul.f32 1.0, %v2173
      %v2175 = vrcp.pop %v2088
      %v2176 = vmul.f32 1.0, %v2175
      %v2177 = vrcp.pop %v2089
      %v2178 = vmul.f32 1.0, %v2177
      %v2179 = vrcp.pop %v2090
      %v2180 = vmul.f32 1.0, %v2179
      %v2181 = vrcp.pop %v2091
      %v2182 = vmul.f32 1.0, %v2181
      %v2183 = vrcp.pop %v2092
      %v2184 = vmul.f32 1.0, %v2183
      %v2185 = vrcp.pop %v2093
      %v2186 = vmul.f32 1.0, %v2185
      %v2187 = vrcp.pop %v2094
      %v2188 = vmul.f32 1.0, %v2187
      %v2189 = vrcp.pop %v2095
      %v2190 = vmul.f32 1.0, %v2189
      %v2191 = vrcp.pop %v2096
      %v2192 = vmul.f32 1.0, %v2191
      %v2193 = vrcp.pop %v2097
      %v2194 = vmul.f32 1.0, %v2193
      %v2195 = vrcp.pop %v2098
      %v2196 = vmul.f32 1.0, %v2195
      %v2197 = vrcp.pop %v2099
      %v2198 = vmul.f32 1.0, %v2197
      %v2199 = vrcp.pop %v2100
      %v2200 = vmul.f32 1.0, %v2199
      %v2201 = vrcp.pop %v2101
      %v2202 = vmul.f32 1.0, %v2201
      %v2203 = vrcp.pop %v2102
      %v2204 = vmul.f32 1.0, %v2203
      %v2205 = vrcp.pop %v2103
      %v2206 = vmul.f32 1.0, %v2205
      %v2207 = vrcp.pop %v2104
      %v2208 = vmul.f32 1.0, %v2207
      %v2209 = vrcp.pop %v2105
      %v2210 = vmul.f32 1.0, %v2209
      %v2211 = vrcp.pop %v2106
      %v2212 = vmul.f32 1.0, %v2211
      %v2213 = vrcp.pop %v2107
      %v2214 = vmul.f32 1.0, %v2213
      %v2215 = vrcp.pop %v2108
      %v2216 = vmul.f32 1.0, %v2215
      %v2217 = vrcp.pop %v2109
      %v2218 = vmul.f32 1.0, %v2217
      %v2219 = vrcp.pop %v2110
      %v2220 = vmul.f32 1.0, %v2219
      %v2221 = vrcp.pop %v2111
      %v2222 = vmul.f32 1.0, %v2221
      %v2223 = vrcp.pop %v2112
      %v2224 = vmul.f32 1.0, %v2223
      %v2225 = vrcp.pop %v2113
      %v2226 = vmul.f32 1.0, %v2225
      %v2227 = vrcp.pop %v2114
      %v2228 = vmul.f32 1.0, %v2227
      %v2229 = vrcp.pop %v2115
      %v2230 = vmul.f32 1.0, %v2229
      %v2231 = vrcp.pop %v2116
      %v2232 = vmul.f32 1.0, %v2231
      %v2233 = vrcp.pop %v2117
      %v2234 = vmul.f32 1.0, %v2233
      %v2235 = vrcp.pop %v2118
      %v2236 = vmul.f32 1.0, %v2235
      %v2237 = vrcp.pop %v2119
      %v2238 = vmul.f32 1.0, %v2237
      %v2239 = vrcp.pop %v2120
      %v2240 = vmul.f32 1.0, %v2239
      %v2241 = vrcp.pop %v2121
      %v2242 = vmul.f32 1.0, %v2241
      %v2243 = vrcp.pop %v2122
      %v2244 = vmul.f32 1.0, %v2243
      %v2245 = vrcp.pop %v2123
      %v2246 = vmul.f32 1.0, %v2245
      %v2247 = vrcp.pop %v2124
      %v2248 = vmul.f32 1.0, %v2247
      %v2249 = vrcp.pop %v2125
      %v2250 = vmul.f32 1.0, %v2249
      %v2251 = vrcp.pop %v2126
      %v2252 = vmul.f32 1.0, %v2251
      %v2253 = vrcp.pop %v2127
      %v2254 = vmul.f32 1.0, %v2253
      %v2255 = vrcp.pop %v2128
      %v2256 = vmul.f32 1.0, %v2255
      %vm2257 = vcmp.ge.f32.partialorder %v1491, 0.0
      %vm2258 = vcmp.ge.f32.partialorder %v1496, 0.0
      %vm2259 = vcmp.ge.f32.partialorder %v1501, 0.0
      %vm2260 = vcmp.ge.f32.partialorder %v1506, 0.0
      %vm2261 = vcmp.ge.f32.partialorder %v1511, 0.0
      %vm2262 = vcmp.ge.f32.partialorder %v1516, 0.0
      %vm2263 = vcmp.ge.f32.partialorder %v1521, 0.0
      %vm2264 = vcmp.ge.f32.partialorder %v1526, 0.0
      %vm2265 = vcmp.ge.f32.partialorder %v1531, 0.0
      %vm2266 = vcmp.ge.f32.partialorder %v1536, 0.0
      %vm2267 = vcmp.ge.f32.partialorder %v1541, 0.0
      %vm2268 = vcmp.ge.f32.partialorder %v1546, 0.0
      %vm2269 = vcmp.ge.f32.partialorder %v1551, 0.0
      %vm2270 = vcmp.ge.f32.partialorder %v1556, 0.0
      %vm2271 = vcmp.ge.f32.partialorder %v1561, 0.0
      %vm2272 = vcmp.ge.f32.partialorder %v1566, 0.0
      %vm2273 = vcmp.ge.f32.partialorder %v1571, 0.0
      %vm2274 = vcmp.ge.f32.partialorder %v1576, 0.0
      %vm2275 = vcmp.ge.f32.partialorder %v1581, 0.0
      %vm2276 = vcmp.ge.f32.partialorder %v1586, 0.0
      %vm2277 = vcmp.ge.f32.partialorder %v1591, 0.0
      %vm2278 = vcmp.ge.f32.partialorder %v1596, 0.0
      %vm2279 = vcmp.ge.f32.partialorder %v1601, 0.0
      %vm2280 = vcmp.ge.f32.partialorder %v1606, 0.0
      %vm2281 = vcmp.ge.f32.partialorder %v1611, 0.0
      %vm2282 = vcmp.ge.f32.partialorder %v1616, 0.0
      %vm2283 = vcmp.ge.f32.partialorder %v1621, 0.0
      %vm2284 = vcmp.ge.f32.partialorder %v1626, 0.0
      %vm2285 = vcmp.ge.f32.partialorder %v1631, 0.0
      %vm2286 = vcmp.ge.f32.partialorder %v1636, 0.0
      %vm2287 = vcmp.ge.f32.partialorder %v1641, 0.0
      %vm2288 = vcmp.ge.f32.partialorder %v1646, 0.0
      %vm2289 = vcmp.ge.f32.partialorder %v1651, 0.0
      %vm2290 = vcmp.ge.f32.partialorder %v1656, 0.0
      %vm2291 = vcmp.ge.f32.partialorder %v1661, 0.0
      %vm2292 = vcmp.ge.f32.partialorder %v1666, 0.0
      %vm2293 = vcmp.ge.f32.partialorder %v1671, 0.0
      %vm2294 = vcmp.ge.f32.partialorder %v1676, 0.0
      %vm2295 = vcmp.ge.f32.partialorder %v1681, 0.0
      %vm2296 = vcmp.ge.f32.partialorder %v1686, 0.0
      %vm2297 = vcmp.ge.f32.partialorder %v1691, 0.0
      %vm2298 = vcmp.ge.f32.partialorder %v1696, 0.0
      %vm2299 = vcmp.ge.f32.partialorder %v1701, 0.0
      %vm2300 = vcmp.ge.f32.partialorder %v1706, 0.0
      %vm2301 = vcmp.ge.f32.partialorder %v1711, 0.0
      %vm2302 = vcmp.ge.f32.partialorder %v1716, 0.0
      %vm2303 = vcmp.ge.f32.partialorder %v1721, 0.0
      %vm2304 = vcmp.ge.f32.partialorder %v1726, 0.0
      %vm2305 = vcmp.ge.f32.partialorder %v1731, 0.0
      %vm2306 = vcmp.ge.f32.partialorder %v1736, 0.0
      %vm2307 = vcmp.ge.f32.partialorder %v1741, 0.0
      %vm2308 = vcmp.ge.f32.partialorder %v1746, 0.0
      %vm2309 = vcmp.ge.f32.partialorder %v1751, 0.0
      %vm2310 = vcmp.ge.f32.partialorder %v1756, 0.0
      %vm2311 = vcmp.ge.f32.partialorder %v1761, 0.0
      %vm2312 = vcmp.ge.f32.partialorder %v1766, 0.0
      %vm2313 = vcmp.ge.f32.partialorder %v1771, 0.0
      %vm2314 = vcmp.ge.f32.partialorder %v1776, 0.0
      %vm2315 = vcmp.ge.f32.partialorder %v1781, 0.0
      %vm2316 = vcmp.ge.f32.partialorder %v1786, 0.0
      %vm2317 = vcmp.ge.f32.partialorder %v1791, 0.0
      %vm2318 = vcmp.ge.f32.partialorder %v1796, 0.0
      %vm2319 = vcmp.ge.f32.partialorder %v1801, 0.0
      %vm2320 = vcmp.ge.f32.partialorder %v1806, 0.0
      %v2321 = vmul.f32 %v1938, %v2130
      %v2322 = vmul.f32 %v1940, %v2132
      %v2323 = vmul.f32 %v1942, %v2134
      %v2324 = vmul.f32 %v1944, %v2136
      %v2325 = vmul.f32 %v1946, %v2138
      %v2326 = vmul.f32 %v1948, %v2140
      %v2327 = vmul.f32 %v1950, %v2142
      %v2328 = vmul.f32 %v1952, %v2144
      %v2329 = vmul.f32 %v1954, %v2146
      %v2330 = vmul.f32 %v1956, %v2148
      %v2331 = vmul.f32 %v1958, %v2150
      %v2332 = vmul.f32 %v1960, %v2152
      %v2333 = vmul.f32 %v1962, %v2154
      %v2334 = vmul.f32 %v1964, %v2156
      %v2335 = vmul.f32 %v1966, %v2158
      %v2336 = vmul.f32 %v1968, %v2160
      %v2337 = vmul.f32 %v1970, %v2162
      %v2338 = vmul.f32 %v1972, %v2164
      %v2339 = vmul.f32 %v1974, %v2166
      %v2340 = vmul.f32 %v1976, %v2168
      %v2341 = vmul.f32 %v1978, %v2170
      %v2342 = vmul.f32 %v1980, %v2172
      %v2343 = vmul.f32 %v1982, %v2174
      %v2344 = vmul.f32 %v1984, %v2176
      %v2345 = vmul.f32 %v1986, %v2178
      %v2346 = vmul.f32 %v1988, %v2180
      %v2347 = vmul.f32 %v1990, %v2182
      %v2348 = vmul.f32 %v1992, %v2184
      %v2349 = vmul.f32 %v1994, %v2186
      %v2350 = vmul.f32 %v1996, %v2188
      %v2351 = vmul.f32 %v1998, %v2190
      %v2352 = vmul.f32 %v2000, %v2192
      %v2353 = vmul.f32 %v2002, %v2194
      %v2354 = vmul.f32 %v2004, %v2196
      %v2355 = vmul.f32 %v2006, %v2198
      %v2356 = vmul.f32 %v2008, %v2200
      %v2357 = vmul.f32 %v2010, %v2202
      %v2358 = vmul.f32 %v2012, %v2204
      %v2359 = vmul.f32 %v2014, %v2206
      %v2360 = vmul.f32 %v2016, %v2208
      %v2361 = vmul.f32 %v2018, %v2210
      %v2362 = vmul.f32 %v2020, %v2212
      %v2363 = vmul.f32 %v2022, %v2214
      %v2364 = vmul.f32 %v2024, %v2216
      %v2365 = vmul.f32 %v2026, %v2218
      %v2366 = vmul.f32 %v2028, %v2220
      %v2367 = vmul.f32 %v2030, %v2222
      %v2368 = vmul.f32 %v2032, %v2224
      %v2369 = vmul.f32 %v2034, %v2226
      %v2370 = vmul.f32 %v2036, %v2228
      %v2371 = vmul.f32 %v2038, %v2230
      %v2372 = vmul.f32 %v2040, %v2232
      %v2373 = vmul.f32 %v2042, %v2234
      %v2374 = vmul.f32 %v2044, %v2236
      %v2375 = vmul.f32 %v2046, %v2238
      %v2376 = vmul.f32 %v2048, %v2240
      %v2377 = vmul.f32 %v2050, %v2242
      %v2378 = vmul.f32 %v2052, %v2244
      %v2379 = vmul.f32 %v2054, %v2246
      %v2380 = vmul.f32 %v2056, %v2248
      %v2381 = vmul.f32 %v2058, %v2250
      %v2382 = vmul.f32 %v2060, %v2252
      %v2383 = vmul.f32 %v2062, %v2254
      %v2384 = vmul.f32 %v2064, %v2256
      %v2385 = vsel %vm2257, %v2130, %v2321
      %v2386 = vsel %vm2258, %v2132, %v2322
      %v2387 = vsel %vm2259, %v2134, %v2323
      %v2388 = vsel %vm2260, %v2136, %v2324
      %v2389 = vsel %vm2261, %v2138, %v2325
      %v2390 = vsel %vm2262, %v2140, %v2326
      %v2391 = vsel %vm2263, %v2142, %v2327
      %v2392 = vsel %vm2264, %v2144, %v2328
      %v2393 = vsel %vm2265, %v2146, %v2329
      %v2394 = vsel %vm2266, %v2148, %v2330
      %v2395 = vsel %vm2267, %v2150, %v2331
      %v2396 = vsel %vm2268, %v2152, %v2332
      %v2397 = vsel %vm2269, %v2154, %v2333
      %v2398 = vsel %vm2270, %v2156, %v2334
      %v2399 = vsel %vm2271, %v2158, %v2335
      %v2400 = vsel %vm2272, %v2160, %v2336
      %v2401 = vsel %vm2273, %v2162, %v2337
      %v2402 = vsel %vm2274, %v2164, %v2338
      %v2403 = vsel %vm2275, %v2166, %v2339
      %v2404 = vsel %vm2276, %v2168, %v2340
      %v2405 = vsel %vm2277, %v2170, %v2341
      %v2406 = vsel %vm2278, %v2172, %v2342
      %v2407 = vsel %vm2279, %v2174, %v2343
      %v2408 = vsel %vm2280, %v2176, %v2344
      %v2409 = vsel %vm2281, %v2178, %v2345
      %v2410 = vsel %vm2282, %v2180, %v2346
      %v2411 = vsel %vm2283, %v2182, %v2347
      %v2412 = vsel %vm2284, %v2184, %v2348
      %v2413 = vsel %vm2285, %v2186, %v2349
      %v2414 = vsel %vm2286, %v2188, %v2350
      %v2415 = vsel %vm2287, %v2190, %v2351
      %v2416 = vsel %vm2288, %v2192, %v2352
      %v2417 = vsel %vm2289, %v2194, %v2353
      %v2418 = vsel %vm2290, %v2196, %v2354
      %v2419 = vsel %vm2291, %v2198, %v2355
      %v2420 = vsel %vm2292, %v2200, %v2356
      %v2421 = vsel %vm2293, %v2202, %v2357
      %v2422 = vsel %vm2294, %v2204, %v2358
      %v2423 = vsel %vm2295, %v2206, %v2359
      %v2424 = vsel %vm2296, %v2208, %v2360
      %v2425 = vsel %vm2297, %v2210, %v2361
      %v2426 = vsel %vm2298, %v2212, %v2362
      %v2427 = vsel %vm2299, %v2214, %v2363
      %v2428 = vsel %vm2300, %v2216, %v2364
      %v2429 = vsel %vm2301, %v2218, %v2365
      %v2430 = vsel %vm2302, %v2220, %v2366
      %v2431 = vsel %vm2303, %v2222, %v2367
      %v2432 = vsel %vm2304, %v2224, %v2368
      %v2433 = vsel %vm2305, %v2226, %v2369
      %v2434 = vsel %vm2306, %v2228, %v2370
      %v2435 = vsel %vm2307, %v2230, %v2371
      %v2436 = vsel %vm2308, %v2232, %v2372
      %v2437 = vsel %vm2309, %v2234, %v2373
      %v2438 = vsel %vm2310, %v2236, %v2374
      %v2439 = vsel %vm2311, %v2238, %v2375
      %v2440 = vsel %vm2312, %v2240, %v2376
      %v2441 = vsel %vm2313, %v2242, %v2377
      %v2442 = vsel %vm2314, %v2244, %v2378
      %v2443 = vsel %vm2315, %v2246, %v2379
      %v2444 = vsel %vm2316, %v2248, %v2380
      %v2445 = vsel %vm2317, %v2250, %v2381
      %v2446 = vsel %vm2318, %v2252, %v2382
      %v2447 = vsel %vm2319, %v2254, %v2383
      %v2448 = vsel %vm2320, %v2256, %v2384
      %v2449 = vsub.f32 1.0, %v2385
      %v2450 = vsub.f32 1.0, %v2386
      %v2451 = vsub.f32 1.0, %v2387
      %v2452 = vsub.f32 1.0, %v2388
      %v2453 = vsub.f32 1.0, %v2389
      %v2454 = vsub.f32 1.0, %v2390
      %v2455 = vsub.f32 1.0, %v2391
      %v2456 = vsub.f32 1.0, %v2392
      %v2457 = vsub.f32 1.0, %v2393
      %v2458 = vsub.f32 1.0, %v2394
      %v2459 = vsub.f32 1.0, %v2395
      %v2460 = vsub.f32 1.0, %v2396
      %v2461 = vsub.f32 1.0, %v2397
      %v2462 = vsub.f32 1.0, %v2398
      %v2463 = vsub.f32 1.0, %v2399
      %v2464 = vsub.f32 1.0, %v2400
      %v2465 = vsub.f32 1.0, %v2401
      %v2466 = vsub.f32 1.0, %v2402
      %v2467 = vsub.f32 1.0, %v2403
      %v2468 = vsub.f32 1.0, %v2404
      %v2469 = vsub.f32 1.0, %v2405
      %v2470 = vsub.f32 1.0, %v2406
      %v2471 = vsub.f32 1.0, %v2407
      %v2472 = vsub.f32 1.0, %v2408
      %v2473 = vsub.f32 1.0, %v2409
      %v2474 = vsub.f32 1.0, %v2410
      %v2475 = vsub.f32 1.0, %v2411
      %v2476 = vsub.f32 1.0, %v2412
      %v2477 = vsub.f32 1.0, %v2413
      %v2478 = vsub.f32 1.0, %v2414
      %v2479 = vsub.f32 1.0, %v2415
      %v2480 = vsub.f32 1.0, %v2416
      %v2481 = vsub.f32 1.0, %v2417
      %v2482 = vsub.f32 1.0, %v2418
      %v2483 = vsub.f32 1.0, %v2419
      %v2484 = vsub.f32 1.0, %v2420
      %v2485 = vsub.f32 1.0, %v2421
      %v2486 = vsub.f32 1.0, %v2422
      %v2487 = vsub.f32 1.0, %v2423
      %v2488 = vsub.f32 1.0, %v2424
      %v2489 = vsub.f32 1.0, %v2425
      %v2490 = vsub.f32 1.0, %v2426
      %v2491 = vsub.f32 1.0, %v2427
      %v2492 = vsub.f32 1.0, %v2428
      %v2493 = vsub.f32 1.0, %v2429
      %v2494 = vsub.f32 1.0, %v2430
      %v2495 = vsub.f32 1.0, %v2431
      %v2496 = vsub.f32 1.0, %v2432
      %v2497 = vsub.f32 1.0, %v2433
      %v2498 = vsub.f32 1.0, %v2434
      %v2499 = vsub.f32 1.0, %v2435
      %v2500 = vsub.f32 1.0, %v2436
      %v2501 = vsub.f32 1.0, %v2437
      %v2502 = vsub.f32 1.0, %v2438
      %v2503 = vsub.f32 1.0, %v2439
      %v2504 = vsub.f32 1.0, %v2440
      %v2505 = vsub.f32 1.0, %v2441
      %v2506 = vsub.f32 1.0, %v2442
      %v2507 = vsub.f32 1.0, %v2443
      %v2508 = vsub.f32 1.0, %v2444
      %v2509 = vsub.f32 1.0, %v2445
      %v2510 = vsub.f32 1.0, %v2446
      %v2511 = vsub.f32 1.0, %v2447
      %v2512 = vsub.f32 1.0, %v2448
      %vm2513 = vcmask 7168
      %2514 = vst.msk [vmem:[%s228] sm:$0xff] %vm2513, %v2449
      %2515 = vst.msk [vmem:[%s228 + $0x8] sm:$0xff] %vm2513, %v2450
      %2516 = vst.msk [vmem:[%s228 + $0x10] sm:$0xff] %vm2513, %v2451
      %2517 = vst.msk [vmem:[%s228 + $0x18] sm:$0xff] %vm2513, %v2452
      %2518 = vst.msk [vmem:[%s228 + $0x20] sm:$0xff] %vm2513, %v2453
      %2519 = vst.msk [vmem:[%s228 + $0x28] sm:$0xff] %vm2513, %v2454
      %2520 = vst.msk [vmem:[%s228 + $0x30] sm:$0xff] %vm2513, %v2455
      %2521 = vst.msk [vmem:[%s228 + $0x38] sm:$0xff] %vm2513, %v2456
      %2522 = vst.msk [vmem:[%s228 + $0x40] sm:$0xff] %vm2513, %v2457
      %2523 = vst.msk [vmem:[%s228 + $0x48] sm:$0xff] %vm2513, %v2458
      %2524 = vst.msk [vmem:[%s228 + $0x50] sm:$0xff] %vm2513, %v2459
      %2525 = vst.msk [vmem:[%s228 + $0x58] sm:$0xff] %vm2513, %v2460
      %2526 = vst.msk [vmem:[%s228 + $0x60] sm:$0xff] %vm2513, %v2461
      %2527 = vst.msk [vmem:[%s228 + $0x68] sm:$0xff] %vm2513, %v2462
      %2528 = vst.msk [vmem:[%s228 + $0x70] sm:$0xff] %vm2513, %v2463
      %2529 = vst.msk [vmem:[%s228 + $0x78] sm:$0xff] %vm2513, %v2464
      %2530 = vst.msk [vmem:[%s228 + $0x80] sm:$0xff] %vm2513, %v2465
      %2531 = vst.msk [vmem:[%s228 + $0x88] sm:$0xff] %vm2513, %v2466
      %2532 = vst.msk [vmem:[%s228 + $0x90] sm:$0xff] %vm2513, %v2467
      %2533 = vst.msk [vmem:[%s228 + $0x98] sm:$0xff] %vm2513, %v2468
      %2534 = vst.msk [vmem:[%s228 + $0xa0] sm:$0xff] %vm2513, %v2469
      %2535 = vst.msk [vmem:[%s228 + $0xa8] sm:$0xff] %vm2513, %v2470
      %2536 = vst.msk [vmem:[%s228 + $0xb0] sm:$0xff] %vm2513, %v2471
      %2537 = vst.msk [vmem:[%s228 + $0xb8] sm:$0xff] %vm2513, %v2472
      %2538 = vst.msk [vmem:[%s228 + $0xc0] sm:$0xff] %vm2513, %v2473
      %2539 = vst.msk [vmem:[%s228 + $0xc8] sm:$0xff] %vm2513, %v2474
      %2540 = vst.msk [vmem:[%s228 + $0xd0] sm:$0xff] %vm2513, %v2475
      %2541 = vst.msk [vmem:[%s228 + $0xd8] sm:$0xff] %vm2513, %v2476
      %2542 = vst.msk [vmem:[%s228 + $0xe0] sm:$0xff] %vm2513, %v2477
      %2543 = vst.msk [vmem:[%s228 + $0xe8] sm:$0xff] %vm2513, %v2478
      %2544 = vst.msk [vmem:[%s228 + $0xf0] sm:$0xff] %vm2513, %v2479
      %2545 = vst.msk [vmem:[%s228 + $0xf8] sm:$0xff] %vm2513, %v2480
      %2546 = vst.msk [vmem:[%s228 + $0x100] sm:$0xff] %vm2513, %v2481
      %2547 = vst.msk [vmem:[%s228 + $0x108] sm:$0xff] %vm2513, %v2482
      %2548 = vst.msk [vmem:[%s228 + $0x110] sm:$0xff] %vm2513, %v2483
      %2549 = vst.msk [vmem:[%s228 + $0x118] sm:$0xff] %vm2513, %v2484
      %2550 = vst.msk [vmem:[%s228 + $0x120] sm:$0xff] %vm2513, %v2485
      %2551 = vst.msk [vmem:[%s228 + $0x128] sm:$0xff] %vm2513, %v2486
      %2552 = vst.msk [vmem:[%s228 + $0x130] sm:$0xff] %vm2513, %v2487
      %2553 = vst.msk [vmem:[%s228 + $0x138] sm:$0xff] %vm2513, %v2488
      %2554 = vst.msk [vmem:[%s228 + $0x140] sm:$0xff] %vm2513, %v2489
      %2555 = vst.msk [vmem:[%s228 + $0x148] sm:$0xff] %vm2513, %v2490
      %2556 = vst.msk [vmem:[%s228 + $0x150] sm:$0xff] %vm2513, %v2491
      %2557 = vst.msk [vmem:[%s228 + $0x158] sm:$0xff] %vm2513, %v2492
      %2558 = vst.msk [vmem:[%s228 + $0x160] sm:$0xff] %vm2513, %v2493
      %2559 = vst.msk [vmem:[%s228 + $0x168] sm:$0xff] %vm2513, %v2494
      %2560 = vst.msk [vmem:[%s228 + $0x170] sm:$0xff] %vm2513, %v2495
      %2561 = vst.msk [vmem:[%s228 + $0x178] sm:$0xff] %vm2513, %v2496
      %2562 = vst.msk [vmem:[%s228 + $0x180] sm:$0xff] %vm2513, %v2497
      %2563 = vst.msk [vmem:[%s228 + $0x188] sm:$0xff] %vm2513, %v2498
      %2564 = vst.msk [vmem:[%s228 + $0x190] sm:$0xff] %vm2513, %v2499
      %2565 = vst.msk [vmem:[%s228 + $0x198] sm:$0xff] %vm2513, %v2500
      %2566 = vst.msk [vmem:[%s228 + $0x1a0] sm:$0xff] %vm2513, %v2501
      %2567 = vst.msk [vmem:[%s228 + $0x1a8] sm:$0xff] %vm2513, %v2502
      %2568 = vst.msk [vmem:[%s228 + $0x1b0] sm:$0xff] %vm2513, %v2503
      %2569 = vst.msk [vmem:[%s228 + $0x1b8] sm:$0xff] %vm2513, %v2504
      %2570 = vst.msk [vmem:[%s228 + $0x1c0] sm:$0xff] %vm2513, %v2505
      %2571 = vst.msk [vmem:[%s228 + $0x1c8] sm:$0xff] %vm2513, %v2506
      %2572 = vst.msk [vmem:[%s228 + $0x1d0] sm:$0xff] %vm2513, %v2507
      %2573 = vst.msk [vmem:[%s228 + $0x1d8] sm:$0xff] %vm2513, %v2508
      %2574 = vst.msk [vmem:[%s228 + $0x1e0] sm:$0xff] %vm2513, %v2509
      %2575 = vst.msk [vmem:[%s228 + $0x1e8] sm:$0xff] %vm2513, %v2510
      %2576 = vst.msk [vmem:[%s228 + $0x1f0] sm:$0xff] %vm2513, %v2511
      %2577 = vst.msk [vmem:[%s228 + $0x1f8] sm:$0xff] %vm2513, %v2512
      %2642 = vrot.lane.b32.xlu0 %v2385, 1
      %v2643 = vpop.permute.xlu0 %2642
      %2644 = vrot.lane.b32.xlu0 %v2386, 1
      %v2645 = vpop.permute.xlu0 %2644
      %2646 = vrot.lane.b32.xlu0 %v2387, 1
      %v2647 = vpop.permute.xlu0 %2646
      %2648 = vrot.lane.b32.xlu0 %v2388, 1
      %v2649 = vpop.permute.xlu0 %2648
      %2650 = vrot.lane.b32.xlu0 %v2389, 1
      %v2651 = vpop.permute.xlu0 %2650
      %2652 = vrot.lane.b32.xlu0 %v2390, 1
      %v2653 = vpop.permute.xlu0 %2652
      %2654 = vrot.lane.b32.xlu0 %v2391, 1
      %v2655 = vpop.permute.xlu0 %2654
      %2656 = vrot.lane.b32.xlu0 %v2392, 1
      %v2657 = vpop.permute.xlu0 %2656
      %2658 = vrot.lane.b32.xlu0 %v2393, 1
      %v2659 = vpop.permute.xlu0 %2658
      %2660 = vrot.lane.b32.xlu0 %v2394, 1
      %v2661 = vpop.permute.xlu0 %2660
      %2662 = vrot.lane.b32.xlu0 %v2395, 1
      %v2663 = vpop.permute.xlu0 %2662
      %2664 = vrot.lane.b32.xlu0 %v2396, 1
      %v2665 = vpop.permute.xlu0 %2664
      %2666 = vrot.lane.b32.xlu0 %v2397, 1
      %v2667 = vpop.permute.xlu0 %2666
      %2668 = vrot.lane.b32.xlu0 %v2398, 1
      %v2669 = vpop.permute.xlu0 %2668
      %2670 = vrot.lane.b32.xlu0 %v2399, 1
      %v2671 = vpop.permute.xlu0 %2670
      %2672 = vrot.lane.b32.xlu0 %v2400, 1
      %v2673 = vpop.permute.xlu0 %2672
      %2674 = vrot.lane.b32.xlu0 %v2401, 1
      %v2675 = vpop.permute.xlu0 %2674
      %2676 = vrot.lane.b32.xlu0 %v2402, 1
      %v2677 = vpop.permute.xlu0 %2676
      %2678 = vrot.lane.b32.xlu0 %v2403, 1
      %v2679 = vpop.permute.xlu0 %2678
      %2680 = vrot.lane.b32.xlu0 %v2404, 1
      %v2681 = vpop.permute.xlu0 %2680
      %2682 = vrot.lane.b32.xlu0 %v2405, 1
      %v2683 = vpop.permute.xlu0 %2682
      %2684 = vrot.lane.b32.xlu0 %v2406, 1
      %v2685 = vpop.permute.xlu0 %2684
      %2686 = vrot.lane.b32.xlu0 %v2407, 1
      %v2687 = vpop.permute.xlu0 %2686
      %2688 = vrot.lane.b32.xlu0 %v2408, 1
      %v2689 = vpop.permute.xlu0 %2688
      %2690 = vrot.lane.b32.xlu0 %v2409, 1
      %v2691 = vpop.permute.xlu0 %2690
      %2692 = vrot.lane.b32.xlu0 %v2410, 1
      %v2693 = vpop.permute.xlu0 %2692
      %2694 = vrot.lane.b32.xlu0 %v2411, 1
      %v2695 = vpop.permute.xlu0 %2694
      %2696 = vrot.lane.b32.xlu0 %v2412, 1
      %v2697 = vpop.permute.xlu0 %2696
      %2698 = vrot.lane.b32.xlu0 %v2413, 1
      %v2699 = vpop.permute.xlu0 %2698
      %2700 = vrot.lane.b32.xlu0 %v2414, 1
      %v2701 = vpop.permute.xlu0 %2700
      %2702 = vrot.lane.b32.xlu0 %v2415, 1
      %v2703 = vpop.permute.xlu0 %2702
      %2704 = vrot.lane.b32.xlu0 %v2416, 1
      %v2705 = vpop.permute.xlu0 %2704
      %2706 = vrot.lane.b32.xlu0 %v2417, 1
      %v2707 = vpop.permute.xlu0 %2706
      %2708 = vrot.lane.b32.xlu0 %v2418, 1
      %v2709 = vpop.permute.xlu0 %2708
      %2710 = vrot.lane.b32.xlu0 %v2419, 1
      %v2711 = vpop.permute.xlu0 %2710
      %2712 = vrot.lane.b32.xlu0 %v2420, 1
      %v2713 = vpop.permute.xlu0 %2712
      %2714 = vrot.lane.b32.xlu0 %v2421, 1
      %v2715 = vpop.permute.xlu0 %2714
      %2716 = vrot.lane.b32.xlu0 %v2422, 1
      %v2717 = vpop.permute.xlu0 %2716
      %2718 = vrot.lane.b32.xlu0 %v2423, 1
      %v2719 = vpop.permute.xlu0 %2718
      %2720 = vrot.lane.b32.xlu0 %v2424, 1
      %v2721 = vpop.permute.xlu0 %2720
      %2722 = vrot.lane.b32.xlu0 %v2425, 1
      %v2723 = vpop.permute.xlu0 %2722
      %2724 = vrot.lane.b32.xlu0 %v2426, 1
      %v2725 = vpop.permute.xlu0 %2724
      %2726 = vrot.lane.b32.xlu0 %v2427, 1
      %v2727 = vpop.permute.xlu0 %2726
      %2728 = vrot.lane.b32.xlu0 %v2428, 1
      %v2729 = vpop.permute.xlu0 %2728
      %2730 = vrot.lane.b32.xlu0 %v2429, 1
      %v2731 = vpop.permute.xlu0 %2730
      %2732 = vrot.lane.b32.xlu0 %v2430, 1
      %v2733 = vpop.permute.xlu0 %2732
      %2734 = vrot.lane.b32.xlu0 %v2431, 1
      %v2735 = vpop.permute.xlu0 %2734
      %2736 = vrot.lane.b32.xlu0 %v2432, 1
      %v2737 = vpop.permute.xlu0 %2736
      %2738 = vrot.lane.b32.xlu0 %v2433, 1
      %v2739 = vpop.permute.xlu0 %2738
      %2740 = vrot.lane.b32.xlu0 %v2434, 1
      %v2741 = vpop.permute.xlu0 %2740
      %2742 = vrot.lane.b32.xlu0 %v2435, 1
      %v2743 = vpop.permute.xlu0 %2742
      %2744 = vrot.lane.b32.xlu0 %v2436, 1
      %v2745 = vpop.permute.xlu0 %2744
      %2746 = vrot.lane.b32.xlu0 %v2437, 1
      %v2747 = vpop.permute.xlu0 %2746
      %2748 = vrot.lane.b32.xlu0 %v2438, 1
      %v2749 = vpop.permute.xlu0 %2748
      %2750 = vrot.lane.b32.xlu0 %v2439, 1
      %v2751 = vpop.permute.xlu0 %2750
      %2752 = vrot.lane.b32.xlu0 %v2440, 1
      %v2753 = vpop.permute.xlu0 %2752
      %2754 = vrot.lane.b32.xlu0 %v2441, 1
      %v2755 = vpop.permute.xlu0 %2754
      %2756 = vrot.lane.b32.xlu0 %v2442, 1
      %v2757 = vpop.permute.xlu0 %2756
      %2758 = vrot.lane.b32.xlu0 %v2443, 1
      %v2759 = vpop.permute.xlu0 %2758
      %2760 = vrot.lane.b32.xlu0 %v2444, 1
      %v2761 = vpop.permute.xlu0 %2760
      %2762 = vrot.lane.b32.xlu0 %v2445, 1
      %v2763 = vpop.permute.xlu0 %2762
      %2764 = vrot.lane.b32.xlu0 %v2446, 1
      %v2765 = vpop.permute.xlu0 %2764
      %2766 = vrot.lane.b32.xlu0 %v2447, 1
      %v2767 = vpop.permute.xlu0 %2766
      %2768 = vrot.lane.b32.xlu0 %v2448, 1
      %v2769 = vpop.permute.xlu0 %2768
      %vm2834 = vcmask 15368
      %2835 = vst.msk [vmem:[%s228] sm:$0xff] %vm2834, %v2643
      %2836 = vst.msk [vmem:[%s228 + $0x8] sm:$0xff] %vm2834, %v2645
      %2837 = vst.msk [vmem:[%s228 + $0x10] sm:$0xff] %vm2834, %v2647
      %2838 = vst.msk [vmem:[%s228 + $0x18] sm:$0xff] %vm2834, %v2649
      %2839 = vst.msk [vmem:[%s228 + $0x20] sm:$0xff] %vm2834, %v2651
      %2840 = vst.msk [vmem:[%s228 + $0x28] sm:$0xff] %vm2834, %v2653
      %2841 = vst.msk [vmem:[%s228 + $0x30] sm:$0xff] %vm2834, %v2655
      %2842 = vst.msk [vmem:[%s228 + $0x38] sm:$0xff] %vm2834, %v2657
      %2843 = vst.msk [vmem:[%s228 + $0x40] sm:$0xff] %vm2834, %v2659
      %2844 = vst.msk [vmem:[%s228 + $0x48] sm:$0xff] %vm2834, %v2661
      %2845 = vst.msk [vmem:[%s228 + $0x50] sm:$0xff] %vm2834, %v2663
      %2846 = vst.msk [vmem:[%s228 + $0x58] sm:$0xff] %vm2834, %v2665
      %2847 = vst.msk [vmem:[%s228 + $0x60] sm:$0xff] %vm2834, %v2667
      %2848 = vst.msk [vmem:[%s228 + $0x68] sm:$0xff] %vm2834, %v2669
      %2849 = vst.msk [vmem:[%s228 + $0x70] sm:$0xff] %vm2834, %v2671
      %2850 = vst.msk [vmem:[%s228 + $0x78] sm:$0xff] %vm2834, %v2673
      %2851 = vst.msk [vmem:[%s228 + $0x80] sm:$0xff] %vm2834, %v2675
      %2852 = vst.msk [vmem:[%s228 + $0x88] sm:$0xff] %vm2834, %v2677
      %2853 = vst.msk [vmem:[%s228 + $0x90] sm:$0xff] %vm2834, %v2679
      %2854 = vst.msk [vmem:[%s228 + $0x98] sm:$0xff] %vm2834, %v2681
      %2855 = vst.msk [vmem:[%s228 + $0xa0] sm:$0xff] %vm2834, %v2683
      %2856 = vst.msk [vmem:[%s228 + $0xa8] sm:$0xff] %vm2834, %v2685
      %2857 = vst.msk [vmem:[%s228 + $0xb0] sm:$0xff] %vm2834, %v2687
      %2858 = vst.msk [vmem:[%s228 + $0xb8] sm:$0xff] %vm2834, %v2689
      %2859 = vst.msk [vmem:[%s228 + $0xc0] sm:$0xff] %vm2834, %v2691
      %2860 = vst.msk [vmem:[%s228 + $0xc8] sm:$0xff] %vm2834, %v2693
      %2861 = vst.msk [vmem:[%s228 + $0xd0] sm:$0xff] %vm2834, %v2695
      %2862 = vst.msk [vmem:[%s228 + $0xd8] sm:$0xff] %vm2834, %v2697
      %2863 = vst.msk [vmem:[%s228 + $0xe0] sm:$0xff] %vm2834, %v2699
      %2864 = vst.msk [vmem:[%s228 + $0xe8] sm:$0xff] %vm2834, %v2701
      %2865 = vst.msk [vmem:[%s228 + $0xf0] sm:$0xff] %vm2834, %v2703
      %2866 = vst.msk [vmem:[%s228 + $0xf8] sm:$0xff] %vm2834, %v2705
      %2867 = vst.msk [vmem:[%s228 + $0x100] sm:$0xff] %vm2834, %v2707
      %2868 = vst.msk [vmem:[%s228 + $0x108] sm:$0xff] %vm2834, %v2709
      %2869 = vst.msk [vmem:[%s228 + $0x110] sm:$0xff] %vm2834, %v2711
      %2870 = vst.msk [vmem:[%s228 + $0x118] sm:$0xff] %vm2834, %v2713
      %2871 = vst.msk [vmem:[%s228 + $0x120] sm:$0xff] %vm2834, %v2715
      %2872 = vst.msk [vmem:[%s228 + $0x128] sm:$0xff] %vm2834, %v2717
      %2873 = vst.msk [vmem:[%s228 + $0x130] sm:$0xff] %vm2834, %v2719
      %2874 = vst.msk [vmem:[%s228 + $0x138] sm:$0xff] %vm2834, %v2721
      %2875 = vst.msk [vmem:[%s228 + $0x140] sm:$0xff] %vm2834, %v2723
      %2876 = vst.msk [vmem:[%s228 + $0x148] sm:$0xff] %vm2834, %v2725
      %2877 = vst.msk [vmem:[%s228 + $0x150] sm:$0xff] %vm2834, %v2727
      %2878 = vst.msk [vmem:[%s228 + $0x158] sm:$0xff] %vm2834, %v2729
      %2879 = vst.msk [vmem:[%s228 + $0x160] sm:$0xff] %vm2834, %v2731
      %2880 = vst.msk [vmem:[%s228 + $0x168] sm:$0xff] %vm2834, %v2733
      %2881 = vst.msk [vmem:[%s228 + $0x170] sm:$0xff] %vm2834, %v2735
      %2882 = vst.msk [vmem:[%s228 + $0x178] sm:$0xff] %vm2834, %v2737
      %2883 = vst.msk [vmem:[%s228 + $0x180] sm:$0xff] %vm2834, %v2739
      %2884 = vst.msk [vmem:[%s228 + $0x188] sm:$0xff] %vm2834, %v2741
      %2885 = vst.msk [vmem:[%s228 + $0x190] sm:$0xff] %vm2834, %v2743
      %2886 = vst.msk [vmem:[%s228 + $0x198] sm:$0xff] %vm2834, %v2745
      %2887 = vst.msk [vmem:[%s228 + $0x1a0] sm:$0xff] %vm2834, %v2747
      %2888 = vst.msk [vmem:[%s228 + $0x1a8] sm:$0xff] %vm2834, %v2749
      %2889 = vst.msk [vmem:[%s228 + $0x1b0] sm:$0xff] %vm2834, %v2751
      %2890 = vst.msk [vmem:[%s228 + $0x1b8] sm:$0xff] %vm2834, %v2753
      %2891 = vst.msk [vmem:[%s228 + $0x1c0] sm:$0xff] %vm2834, %v2755
      %2892 = vst.msk [vmem:[%s228 + $0x1c8] sm:$0xff] %vm2834, %v2757
      %2893 = vst.msk [vmem:[%s228 + $0x1d0] sm:$0xff] %vm2834, %v2759
      %2894 = vst.msk [vmem:[%s228 + $0x1d8] sm:$0xff] %vm2834, %v2761
      %2895 = vst.msk [vmem:[%s228 + $0x1e0] sm:$0xff] %vm2834, %v2763
      %2896 = vst.msk [vmem:[%s228 + $0x1e8] sm:$0xff] %vm2834, %v2765
      %2897 = vst.msk [vmem:[%s228 + $0x1f0] sm:$0xff] %vm2834, %v2767
      %2898 = vst.msk [vmem:[%s228 + $0x1f8] sm:$0xff] %vm2834, %v2769
      %s2899 = smul.u32 64, %s18
      %p2900 = scmp.lt.s32.totalorder %s2899, 255
      %s2901 = scalar_select %p2900, %s2899, 255
      %s2902 = smul.addr %s2901, 8
      %s2903 = scalar_lea.vmem %s5, %s2902
      // Predicated region
      $region41: #{tpu_custom_call.1} parent=39 // pred_check
        %p2904 = pneg %p146
      $region42: #{tpu_custom_call.1} parent=39 // pred_check_branch
        %2906 = sbr.rel (%p2904) target = $region44
      $region43: #{tpu_custom_call.1} parent=39 // pred_region
        %s2907 = smul.u32 64, %s18
      $region44: #{tpu_custom_call.1} parent=39 // pred_fallthru
        _
    $region40: #{tpu_custom_call.1} parent=5 // pred_fallthru
      _
    %p2908 = scmp.le.s32.totalorder 2, %s13
    // Predicated region
    $region45: #{tpu_custom_call.1} parent=5 // pred_check
      %p2909 = pneg %p2908
    $region46: #{tpu_custom_call.1} parent=5 // pred_check_branch
      %2911 = sbr.rel (%p2909) target = $region48
    $region47: #{tpu_custom_call.1} parent=5 // pred_region
      %s2912 = ssub.s32 %s13, 2
      // Predicated region
      $region49: #{tpu_custom_call.1} parent=47 // pred_check
        %p2913 = pneg %p152
      $region50: #{tpu_custom_call.1} parent=47 // pred_check_branch
        %2915 = sbr.rel (%p2913) target = $region52
      $region51: #{tpu_custom_call.1} parent=47 // pred_region
        %s2916 = smul.u32 64, %s19
        %p2917 = scmp.lt.s32.totalorder %s2916, 255
        %s2918 = scalar_select %p2917, %s2916, 255
        %s2919 = smul.addr %s2918, 8
        %s2920 = scalar_lea.vmem %s5, %s2919
      $region52: #{tpu_custom_call.1} parent=47 // pred_fallthru
        _
    $region48: #{tpu_custom_call.1} parent=5 // pred_fallthru
      _
  $region6: #{tpu_custom_call.1} parent=0 // loop_footer
    %s17 = sadd.s32 1, %s13
  $region7: #{tpu_custom_call.1} parent=0 // loop_footer_branch
    %12 = sbr.rel target = $region3
  $region8: #{tpu_custom_call.1} parent=0 // loop_exit
    _

</llo_original>
